<compile_context>
chip_gen: v5e
topology: v5e:2x2
jax: 0.10.0
libtpu: 0.0.40
codegen_flags: <defaults>
</compile_context>

<pallas_src>
import functools

import jax
import jax.numpy as jnp
from jax import lax
from jax.experimental import pallas as pl
from jax.experimental.pallas import tpu as pltpu


def _graph_conv_block_kernel(adj_ref, edge_ref, node_ref,
                             we1_ref, wij1_ref, scale1_ref, shift1_ref,
                             we2_ref, wij2_ref, scale2_ref, shift2_ref,
                             o_ref, *, nout, edge_nin, n):
    f32 = jnp.float32
    # Shared across both layers: adjacency mask (dilation == 1), edge maps, identity.
    A3 = (adj_ref[...] == 1.0)[None, :, :]                 # (1, N, N) bool
    edge3 = edge_ref[...]                                  # (E, N, N)
    rows = lax.broadcasted_iota(jnp.int32, (n, n), 0)
    cols = lax.broadcasted_iota(jnp.int32, (n, n), 1)
    eye3 = (rows == cols)[None, :, :]                      # (1, N, N) bool

    def layer(node_feat, we_ref, wij_ref, scale_ref, shift_ref):
        # NodeConv: both 1x1 convs as ONE (2*nout, Cin) @ (Cin, N) MXU matmul.
        vij = jnp.dot(wij_ref[...], node_feat, preferred_element_type=f32)  # (2*nout, N)
        vi = vij[:nout, :]                                                  # (nout, N)
        vj = vij[nout:, :]                                                  # (nout, N)

        # EdgeConv 1x1: e[o,i,j] = sum_c We[o,c] * edge[c,i,j], vectorized over all
        # output channels (E is tiny, contraction stays on the VPU; no per-o unroll).
        we = we_ref[...]                                                    # (nout, 1, E)
        e = we[:, :, 0:1] * edge3[0][None, :, :]                            # (nout, N, N)
        for c in range(1, edge_nin):
            e = e + we[:, :, c:c + 1] * edge3[c][None, :, :]

        # Masked softmax over j, stacked over all output channels.
        s = jnp.where(A3, e, f32(-1e10))                                    # (nout, N, N)
        m = jnp.max(s, axis=-1, keepdims=True)
        p = jnp.exp(s - m)
        inv = pl.reciprocal(jnp.sum(p, axis=-1, keepdims=True), approx=True)
        ew = jnp.where(A3, p * inv, f32(0.0))                               # (nout, N, N)

        # Collapsed j-reduction: sum_j A*(eye*vi_j+(1-eye)*vj_j)*ew
        #                      = sum_j ew * where(eye, vi_j, vj_j)
        V = jnp.where(eye3, vi[:, None, :], vj[:, None, :])                 # (nout, N, N)
        x = jnp.sum(ew * V, axis=-1)                                        # (nout, N)

        # BatchNorm1d (eval mode, folded) + ELU(alpha=1).
        y = x * scale_ref[...] + shift_ref[...]
        return jnp.where(y > 0.0, y, jnp.exp(y) - 1.0)

    x1 = layer(node_ref[...], we1_ref, wij1_ref, scale1_ref, shift1_ref)    # (nout, N)
    o_ref[...] = layer(x1, we2_ref, wij2_ref, scale2_ref, shift2_ref)       # (nout, N)


def graph_conv_block(adj, edge, node, p):
    """GraphConvBlock.forward: x = gc1(adj, edge, node); x = gc2(adj, edge, x).

    Returns (B, nout, N) float32 (PyTorch NCW layout)."""
    B, E, N, _ = edge.shape
    C = node.shape[1]
    nout = p["we1"].shape[0]

    def prep(we, wi, wj, scale, shift):
        return (we.reshape(nout, 1, E).astype(jnp.float32),
                jnp.concatenate([wi, wj], axis=0).astype(jnp.float32),
                scale.reshape(nout, 1).astype(jnp.float32),
                shift.reshape(nout, 1).astype(jnp.float32))

    we1, wij1, sc1, sh1 = prep(p["we1"], p["wi1"], p["wj1"], p["scale1"], p["shift1"])
    we2, wij2, sc2, sh2 = prep(p["we2"], p["wi2"], p["wj2"], p["scale2"], p["shift2"])

    kernel = functools.partial(_graph_conv_block_kernel, nout=nout, edge_nin=E, n=N)

    def bcast_spec(shape):  # batch-invariant weights / BN params (full-array blocks)
        nd = len(shape)
        return pl.BlockSpec(shape, lambda b, _nd=nd: (0,) * _nd)

    grid_spec = pltpu.PrefetchScalarGridSpec(
        num_scalar_prefetch=0,
        grid=(B,),
        in_specs=[
            pl.BlockSpec((None, N, N), lambda b: (b, 0, 0)),          # adj
            pl.BlockSpec((None, E, N, N), lambda b: (b, 0, 0, 0)),    # edge (read once)
            pl.BlockSpec((None, C, N), lambda b: (b, 0, 0)),          # node
            bcast_spec((nout, 1, E)),                                 # We1
            bcast_spec((2 * nout, C)),                                # [Wi1; Wj1]
            bcast_spec((nout, 1)),                                    # bn1 scale
            bcast_spec((nout, 1)),                                    # bn1 shift
            bcast_spec((nout, 1, E)),                                 # We2
            bcast_spec((2 * nout, nout)),                             # [Wi2; Wj2]
            bcast_spec((nout, 1)),                                    # bn2 scale
            bcast_spec((nout, 1)),                                    # bn2 shift
        ],
        out_specs=pl.BlockSpec((None, nout, N), lambda b: (b, 0, 0)),  # lane-dense over N
    )
    return pl.pallas_call(
        kernel,
        out_shape=jax.ShapeDtypeStruct((B, nout, N), jnp.float32),
        grid_spec=grid_spec,
        compiler_params=pltpu.CompilerParams(dimension_semantics=("parallel",)),
    )(adj, edge, node, we1, wij1, sc1, sh1, we2, wij2, sc2, sh2)


def _reference(adj, edge, node, p):
    """Pure-JAX reference mirroring the PyTorch forward (eval-mode BN)."""
    def layer(node_feat, we, wi, wj, scale, shift):
        A = (adj == 1.0).astype(jnp.float32)[:, None]                 # (B,1,N,N)
        e = jnp.einsum("oc,bcij->boij", we, edge)
        s = e * A + (-1e10) * (A == 0.0).astype(jnp.float32)
        sm = jax.nn.softmax(s, axis=-1)
        ew = sm * A
        vi = jnp.einsum("oc,bcj->boj", wi, node_feat)
        vj = jnp.einsum("oc,bcj->boj", wj, node_feat)
        eye = jnp.eye(adj.shape[-1], dtype=jnp.float32)
        nf = A * (eye[None, None] * vi[:, :, None, :]
                  + (1.0 - eye)[None, None] * vj[:, :, None, :])
        x = (nf * ew).sum(-1)                                         # (B,nout,N)
        y = x * scale[None, :, None] + shift[None, :, None]
        return jnp.where(y > 0.0, y, jnp.exp(y) - 1.0)

    x1 = layer(node, p["we1"], p["wi1"], p["wj1"], p["scale1"], p["shift1"])
    return layer(x1, p["we2"], p["wi2"], p["wj2"], p["scale2"], p["shift2"])


def _fold_bn(gamma, beta, rmean, rvar, eps=1e-5):
    scale = gamma / jnp.sqrt(rvar + eps)
    return scale, beta - rmean * scale


if __name__ == "__main__":
    B, E, C, NOUT, N = 2, 4, 4, 8, 16
    key = jax.random.PRNGKey(0)
    ks = jax.random.split(key, 16)

    # Inputs
    adj = jax.random.randint(ks[0], (B, N, N), 0, 3).astype(jnp.float32)
    edge = jax.random.normal(ks[1], (B, E, N, N), jnp.float32)
    node = jax.random.normal(ks[2], (B, C, N), jnp.float32)

    # Deterministic parameters (synthetic, shapes from the module __init__)
    we1 = 0.2 * jax.random.normal(ks[3], (NOUT, E), jnp.float32)
    wi1 = 0.2 * jax.random.normal(ks[4], (NOUT, C), jnp.float32)
    wj1 = 0.2 * jax.random.normal(ks[5], (NOUT, C), jnp.float32)
    g1 = 1.0 + 0.05 * jax.random.normal(ks[6], (NOUT,), jnp.float32)
    b1 = 0.05 * jax.random.normal(ks[7], (NOUT,), jnp.float32)
    rm1 = 0.05 * jax.random.normal(ks[8], (NOUT,), jnp.float32)
    rv1 = 1.0 + 0.1 * jnp.abs(jax.random.normal(ks[9], (NOUT,), jnp.float32))
    scale1, shift1 = _fold_bn(g1, b1, rm1, rv1)

    we2 = 0.2 * jax.random.normal(ks[10], (NOUT, E), jnp.float32)
    wi2 = 0.2 * jax.random.normal(ks[11], (NOUT, NOUT), jnp.float32)
    wj2 = 0.2 * jax.random.normal(ks[12], (NOUT, NOUT), jnp.float32)
    g2 = 1.0 + 0.05 * jax.random.normal(ks[13], (NOUT,), jnp.float32)
    b2 = 0.05 * jax.random.normal(ks[14], (NOUT,), jnp.float32)
    rm2 = jnp.zeros((NOUT,), jnp.float32)
    rv2 = jnp.ones((NOUT,), jnp.float32)
    scale2, shift2 = _fold_bn(g2, b2, rm2, rv2)

    params = dict(we1=we1, wi1=wi1, wj1=wj1, scale1=scale1, shift1=shift1,
                  we2=we2, wi2=wi2, wj2=wj2, scale2=scale2, shift2=shift2)

    out = jax.block_until_ready(graph_conv_block(adj, edge, node, params))
    assert out.shape == (B, NOUT, N), out.shape

    ref = jax.block_until_ready(_reference(adj, edge, node, params))
    # Tolerance accounts for the approximate EUP reciprocal in the in-kernel softmax.
    assert jnp.allclose(out, ref, rtol=2e-3, atol=2e-3), float(jnp.max(jnp.abs(out - ref)))

    print("KERNEL_OK")
</pallas_src>

<mosaic_0001>
module attributes {stable_mosaic.version = 11 : i64} {
  func.func @_graph_conv_block_kernel(%arg0: i32, %arg1: memref<1x16x16xf32, #tpu.memory_space<vmem>>, %arg2: memref<1x4x16x16xf32, #tpu.memory_space<vmem>>, %arg3: memref<1x4x16xf32, #tpu.memory_space<vmem>>, %arg4: memref<8x1x4xf32, #tpu.memory_space<vmem>>, %arg5: memref<16x4xf32, #tpu.memory_space<vmem>>, %arg6: memref<8x1xf32, #tpu.memory_space<vmem>>, %arg7: memref<8x1xf32, #tpu.memory_space<vmem>>, %arg8: memref<8x1x4xf32, #tpu.memory_space<vmem>>, %arg9: memref<16x8xf32, #tpu.memory_space<vmem>>, %arg10: memref<8x1xf32, #tpu.memory_space<vmem>>, %arg11: memref<8x1xf32, #tpu.memory_space<vmem>>, %arg12: memref<1x8x16xf32, #tpu.memory_space<vmem>>) attributes {dimension_semantics = [#tpu.dimension_semantics<parallel>], iteration_bounds = array<i64: 2>, scalar_prefetch = 0 : i64, scratch_operands = 0 : i64, tpu.core_type = #tpu.core_type<tc>, window_params = [{transform_indices = @transform_0, window_bounds = array<i64: 1, 16, 16>}, {transform_indices = @transform_1, window_bounds = array<i64: 1, 4, 16, 16>}, {transform_indices = @transform_2, window_bounds = array<i64: 1, 4, 16>}, {pipeline_mode = #tpu.pipeline_mode<synchronous>, transform_indices = @transform_3, window_bounds = array<i64: 8, 1, 4>}, {pipeline_mode = #tpu.pipeline_mode<synchronous>, transform_indices = @transform_4, window_bounds = array<i64: 16, 4>}, {pipeline_mode = #tpu.pipeline_mode<synchronous>, transform_indices = @transform_5, window_bounds = array<i64: 8, 1>}, {pipeline_mode = #tpu.pipeline_mode<synchronous>, transform_indices = @transform_6, window_bounds = array<i64: 8, 1>}, {pipeline_mode = #tpu.pipeline_mode<synchronous>, transform_indices = @transform_7, window_bounds = array<i64: 8, 1, 4>}, {pipeline_mode = #tpu.pipeline_mode<synchronous>, transform_indices = @transform_8, window_bounds = array<i64: 16, 8>}, {pipeline_mode = #tpu.pipeline_mode<synchronous>, transform_indices = @transform_9, window_bounds = array<i64: 8, 1>}, {pipeline_mode = #tpu.pipeline_mode<synchronous>, transform_indices = @transform_10, window_bounds = array<i64: 8, 1>}, {transform_indices = @transform_11, window_bounds = array<i64: 1, 8, 16>}]} {
    %c0 = arith.constant 0 : index
    %c0_0 = arith.constant 0 : index
    %c0_1 = arith.constant 0 : index
    %0 = vector.load %arg1[%c0, %c0_0, %c0_1] : memref<1x16x16xf32, #tpu.memory_space<vmem>>, vector<1x16x16xf32>
    %1 = vector.shape_cast %0 : vector<1x16x16xf32> to vector<16x16xf32>
    %cst = arith.constant 1.000000e+00 : f32
    %2 = vector.broadcast %cst : f32 to vector<16x16xf32>
    %3 = arith.cmpf oeq, %1, %2 : vector<16x16xf32>
    %4 = vector.shape_cast %3 : vector<16x16xi1> to vector<1x16x16xi1>
    %c0_2 = arith.constant 0 : index
    %c0_3 = arith.constant 0 : index
    %c0_4 = arith.constant 0 : index
    %c0_5 = arith.constant 0 : index
    %5 = vector.load %arg2[%c0_2, %c0_3, %c0_4, %c0_5] : memref<1x4x16x16xf32, #tpu.memory_space<vmem>>, vector<1x4x16x16xf32>
    %6 = vector.shape_cast %5 : vector<1x4x16x16xf32> to vector<4x16x16xf32>
    %7 = tpu.iota {dimensions = array<i32: 0>} : vector<16x16xi32>
    %8 = tpu.iota {dimensions = array<i32: 1>} : vector<16x16xi32>
    %9 = arith.cmpi eq, %7, %8 : vector<16x16xi32>
    %10 = vector.shape_cast %9 : vector<16x16xi1> to vector<1x16x16xi1>
    %c0_6 = arith.constant 0 : index
    %c0_7 = arith.constant 0 : index
    %c0_8 = arith.constant 0 : index
    %11 = vector.load %arg3[%c0_6, %c0_7, %c0_8] : memref<1x4x16xf32, #tpu.memory_space<vmem>>, vector<1x4x16xf32>
    %12 = vector.shape_cast %11 : vector<1x4x16xf32> to vector<4x16xf32>
    %c0_9 = arith.constant 0 : index
    %c0_10 = arith.constant 0 : index
    %13 = vector.load %arg5[%c0_9, %c0_10] : memref<16x4xf32, #tpu.memory_space<vmem>>, vector<16x4xf32>
    %cst_11 = arith.constant dense<0.000000e+00> : vector<16x16xf32>
    %14 = tpu.matmul %13, %12, %cst_11 {dimension_numbers = #tpu.dot_dimension_numbers<[1], [0], [0], [1], [0, 0, 1, 1], [], []>} : vector<16x4xf32>, vector<4x16xf32>, vector<16x16xf32> -> vector<16x16xf32>
    %15 = vector.extract_strided_slice %14 {offsets = [0, 0], sizes = [8, 16], strides = [1, 1]} : vector<16x16xf32> to vector<8x16xf32>
    %16 = vector.extract_strided_slice %14 {offsets = [8, 0], sizes = [8, 16], strides = [1, 1]} : vector<16x16xf32> to vector<8x16xf32>
    %c0_12 = arith.constant 0 : index
    %c0_13 = arith.constant 0 : index
    %c0_14 = arith.constant 0 : index
    %17 = vector.load %arg4[%c0_12, %c0_13, %c0_14] : memref<8x1x4xf32, #tpu.memory_space<vmem>>, vector<8x1x4xf32>
    %18 = vector.extract_strided_slice %17 {offsets = [0, 0, 0], sizes = [8, 1, 1], strides = [1, 1, 1]} : vector<8x1x4xf32> to vector<8x1x1xf32>
    %19 = vector.extract_strided_slice %6 {offsets = [0, 0, 0], sizes = [1, 16, 16], strides = [1, 1, 1]} : vector<4x16x16xf32> to vector<1x16x16xf32>
    %20 = vector.shape_cast %19 : vector<1x16x16xf32> to vector<16x16xf32>
    %21 = vector.shape_cast %20 : vector<16x16xf32> to vector<1x16x16xf32>
    %22 = vector.broadcast %18 : vector<8x1x1xf32> to vector<8x16x16xf32>
    %23 = vector.broadcast %21 : vector<1x16x16xf32> to vector<8x16x16xf32>
    %24 = arith.mulf %22, %23 : vector<8x16x16xf32>
    %25 = vector.extract_strided_slice %17 {offsets = [0, 0, 1], sizes = [8, 1, 1], strides = [1, 1, 1]} : vector<8x1x4xf32> to vector<8x1x1xf32>
    %26 = vector.extract_strided_slice %6 {offsets = [1, 0, 0], sizes = [1, 16, 16], strides = [1, 1, 1]} : vector<4x16x16xf32> to vector<1x16x16xf32>
    %27 = vector.shape_cast %26 : vector<1x16x16xf32> to vector<16x16xf32>
    %28 = vector.shape_cast %27 : vector<16x16xf32> to vector<1x16x16xf32>
    %29 = vector.broadcast %25 : vector<8x1x1xf32> to vector<8x16x16xf32>
    %30 = vector.broadcast %28 : vector<1x16x16xf32> to vector<8x16x16xf32>
    %31 = arith.mulf %29, %30 : vector<8x16x16xf32>
    %32 = arith.addf %24, %31 : vector<8x16x16xf32>
    %33 = vector.extract_strided_slice %17 {offsets = [0, 0, 2], sizes = [8, 1, 1], strides = [1, 1, 1]} : vector<8x1x4xf32> to vector<8x1x1xf32>
    %34 = vector.extract_strided_slice %6 {offsets = [2, 0, 0], sizes = [1, 16, 16], strides = [1, 1, 1]} : vector<4x16x16xf32> to vector<1x16x16xf32>
    %35 = vector.shape_cast %34 : vector<1x16x16xf32> to vector<16x16xf32>
    %36 = vector.shape_cast %35 : vector<16x16xf32> to vector<1x16x16xf32>
    %37 = vector.broadcast %33 : vector<8x1x1xf32> to vector<8x16x16xf32>
    %38 = vector.broadcast %36 : vector<1x16x16xf32> to vector<8x16x16xf32>
    %39 = arith.mulf %37, %38 : vector<8x16x16xf32>
    %40 = arith.addf %32, %39 : vector<8x16x16xf32>
    %41 = vector.extract_strided_slice %17 {offsets = [0, 0, 3], sizes = [8, 1, 1], strides = [1, 1, 1]} : vector<8x1x4xf32> to vector<8x1x1xf32>
    %42 = vector.extract_strided_slice %6 {offsets = [3, 0, 0], sizes = [1, 16, 16], strides = [1, 1, 1]} : vector<4x16x16xf32> to vector<1x16x16xf32>
    %43 = vector.shape_cast %42 : vector<1x16x16xf32> to vector<16x16xf32>
    %44 = vector.shape_cast %43 : vector<16x16xf32> to vector<1x16x16xf32>
    %45 = vector.broadcast %41 : vector<8x1x1xf32> to vector<8x16x16xf32>
    %46 = vector.broadcast %44 : vector<1x16x16xf32> to vector<8x16x16xf32>
    %47 = arith.mulf %45, %46 : vector<8x16x16xf32>
    %48 = arith.addf %40, %47 : vector<8x16x16xf32>
    %cst_15 = arith.constant -1.000000e+10 : f32
    %49 = vector.shape_cast %4 : vector<1x16x16xi1> to vector<1x16x16xi1>
    %50 = vector.broadcast %49 : vector<1x16x16xi1> to vector<8x16x16xi1>
    %51 = vector.broadcast %cst_15 : f32 to vector<8x16x16xf32>
    %52 = arith.select %50, %48, %51 : vector<8x16x16xi1>, vector<8x16x16xf32>
    %cst_16 = arith.constant dense<0xFF800000> : vector<8x16xf32>
    %53 = vector.multi_reduction <maximumf>, %52, %cst_16 [2] : vector<8x16x16xf32> to vector<8x16xf32>
    %54 = vector.shape_cast %53 : vector<8x16xf32> to vector<8x16x1xf32>
    %55 = vector.broadcast %54 : vector<8x16x1xf32> to vector<8x16x16xf32>
    %56 = arith.subf %52, %55 : vector<8x16x16xf32>
    %57 = math.exp %56 : vector<8x16x16xf32>
    %cst_17 = arith.constant dense<0.000000e+00> : vector<8x16xf32>
    %58 = vector.multi_reduction <add>, %57, %cst_17 [2] : vector<8x16x16xf32> to vector<8x16xf32>
    %59 = vector.shape_cast %58 : vector<8x16xf32> to vector<8x16x1xf32>
    %60 = tpu.reciprocal %59 {approx = true} : vector<8x16x1xf32> -> vector<8x16x1xf32>
    %61 = vector.broadcast %60 : vector<8x16x1xf32> to vector<8x16x16xf32>
    %62 = arith.mulf %57, %61 : vector<8x16x16xf32>
    %cst_18 = arith.constant 0.000000e+00 : f32
    %63 = vector.shape_cast %4 : vector<1x16x16xi1> to vector<1x16x16xi1>
    %64 = vector.broadcast %63 : vector<1x16x16xi1> to vector<8x16x16xi1>
    %65 = vector.broadcast %cst_18 : f32 to vector<8x16x16xf32>
    %66 = arith.select %64, %62, %65 : vector<8x16x16xi1>, vector<8x16x16xf32>
    %67 = vector.shape_cast %15 : vector<8x16xf32> to vector<8x1x16xf32>
    %68 = vector.shape_cast %16 : vector<8x16xf32> to vector<8x1x16xf32>
    %69 = vector.shape_cast %10 : vector<1x16x16xi1> to vector<1x16x16xi1>
    %70 = vector.broadcast %69 : vector<1x16x16xi1> to vector<8x16x16xi1>
    %71 = vector.shape_cast %67 : vector<8x1x16xf32> to vector<8x1x16xf32>
    %72 = vector.broadcast %71 : vector<8x1x16xf32> to vector<8x16x16xf32>
    %73 = vector.shape_cast %68 : vector<8x1x16xf32> to vector<8x1x16xf32>
    %74 = vector.broadcast %73 : vector<8x1x16xf32> to vector<8x16x16xf32>
    %75 = arith.select %70, %72, %74 : vector<8x16x16xi1>, vector<8x16x16xf32>
    %76 = arith.mulf %66, %75 : vector<8x16x16xf32>
    %cst_19 = arith.constant dense<0.000000e+00> : vector<8x16xf32>
    %77 = vector.multi_reduction <add>, %76, %cst_19 [2] : vector<8x16x16xf32> to vector<8x16xf32>
    %c0_20 = arith.constant 0 : index
    %c0_21 = arith.constant 0 : index
    %78 = vector.load %arg6[%c0_20, %c0_21] : memref<8x1xf32, #tpu.memory_space<vmem>>, vector<8x1xf32>
    %79 = vector.broadcast %78 : vector<8x1xf32> to vector<8x16xf32>
    %80 = arith.mulf %77, %79 : vector<8x16xf32>
    %c0_22 = arith.constant 0 : index
    %c0_23 = arith.constant 0 : index
    %81 = vector.load %arg7[%c0_22, %c0_23] : memref<8x1xf32, #tpu.memory_space<vmem>>, vector<8x1xf32>
    %82 = vector.broadcast %81 : vector<8x1xf32> to vector<8x16xf32>
    %83 = arith.addf %80, %82 : vector<8x16xf32>
    %cst_24 = arith.constant 0.000000e+00 : f32
    %84 = vector.broadcast %cst_24 : f32 to vector<8x16xf32>
    %85 = arith.cmpf ogt, %83, %84 : vector<8x16xf32>
    %86 = math.exp %83 : vector<8x16xf32>
    %cst_25 = arith.constant 1.000000e+00 : f32
    %87 = vector.broadcast %cst_25 : f32 to vector<8x16xf32>
    %88 = arith.subf %86, %87 : vector<8x16xf32>
    %89 = arith.select %85, %83, %88 : vector<8x16xi1>, vector<8x16xf32>
    %c0_26 = arith.constant 0 : index
    %c0_27 = arith.constant 0 : index
    %90 = vector.load %arg9[%c0_26, %c0_27] : memref<16x8xf32, #tpu.memory_space<vmem>>, vector<16x8xf32>
    %cst_28 = arith.constant dense<0.000000e+00> : vector<16x16xf32>
    %91 = tpu.matmul %90, %89, %cst_28 {dimension_numbers = #tpu.dot_dimension_numbers<[1], [0], [0], [1], [0, 0, 1, 1], [], []>} : vector<16x8xf32>, vector<8x16xf32>, vector<16x16xf32> -> vector<16x16xf32>
    %92 = vector.extract_strided_slice %91 {offsets = [0, 0], sizes = [8, 16], strides = [1, 1]} : vector<16x16xf32> to vector<8x16xf32>
    %93 = vector.extract_strided_slice %91 {offsets = [8, 0], sizes = [8, 16], strides = [1, 1]} : vector<16x16xf32> to vector<8x16xf32>
    %c0_29 = arith.constant 0 : index
    %c0_30 = arith.constant 0 : index
    %c0_31 = arith.constant 0 : index
    %94 = vector.load %arg8[%c0_29, %c0_30, %c0_31] : memref<8x1x4xf32, #tpu.memory_space<vmem>>, vector<8x1x4xf32>
    %95 = vector.extract_strided_slice %94 {offsets = [0, 0, 0], sizes = [8, 1, 1], strides = [1, 1, 1]} : vector<8x1x4xf32> to vector<8x1x1xf32>
    %96 = vector.extract_strided_slice %6 {offsets = [0, 0, 0], sizes = [1, 16, 16], strides = [1, 1, 1]} : vector<4x16x16xf32> to vector<1x16x16xf32>
    %97 = vector.shape_cast %96 : vector<1x16x16xf32> to vector<16x16xf32>
    %98 = vector.shape_cast %97 : vector<16x16xf32> to vector<1x16x16xf32>
    %99 = vector.broadcast %95 : vector<8x1x1xf32> to vector<8x16x16xf32>
    %100 = vector.broadcast %98 : vector<1x16x16xf32> to vector<8x16x16xf32>
    %101 = arith.mulf %99, %100 : vector<8x16x16xf32>
    %102 = vector.extract_strided_slice %94 {offsets = [0, 0, 1], sizes = [8, 1, 1], strides = [1, 1, 1]} : vector<8x1x4xf32> to vector<8x1x1xf32>
    %103 = vector.extract_strided_slice %6 {offsets = [1, 0, 0], sizes = [1, 16, 16], strides = [1, 1, 1]} : vector<4x16x16xf32> to vector<1x16x16xf32>
    %104 = vector.shape_cast %103 : vector<1x16x16xf32> to vector<16x16xf32>
    %105 = vector.shape_cast %104 : vector<16x16xf32> to vector<1x16x16xf32>
    %106 = vector.broadcast %102 : vector<8x1x1xf32> to vector<8x16x16xf32>
    %107 = vector.broadcast %105 : vector<1x16x16xf32> to vector<8x16x16xf32>
    %108 = arith.mulf %106, %107 : vector<8x16x16xf32>
    %109 = arith.addf %101, %108 : vector<8x16x16xf32>
    %110 = vector.extract_strided_slice %94 {offsets = [0, 0, 2], sizes = [8, 1, 1], strides = [1, 1, 1]} : vector<8x1x4xf32> to vector<8x1x1xf32>
    %111 = vector.extract_strided_slice %6 {offsets = [2, 0, 0], sizes = [1, 16, 16], strides = [1, 1, 1]} : vector<4x16x16xf32> to vector<1x16x16xf32>
    %112 = vector.shape_cast %111 : vector<1x16x16xf32> to vector<16x16xf32>
    %113 = vector.shape_cast %112 : vector<16x16xf32> to vector<1x16x16xf32>
    %114 = vector.broadcast %110 : vector<8x1x1xf32> to vector<8x16x16xf32>
    %115 = vector.broadcast %113 : vector<1x16x16xf32> to vector<8x16x16xf32>
    %116 = arith.mulf %114, %115 : vector<8x16x16xf32>
    %117 = arith.addf %109, %116 : vector<8x16x16xf32>
    %118 = vector.extract_strided_slice %94 {offsets = [0, 0, 3], sizes = [8, 1, 1], strides = [1, 1, 1]} : vector<8x1x4xf32> to vector<8x1x1xf32>
    %119 = vector.extract_strided_slice %6 {offsets = [3, 0, 0], sizes = [1, 16, 16], strides = [1, 1, 1]} : vector<4x16x16xf32> to vector<1x16x16xf32>
    %120 = vector.shape_cast %119 : vector<1x16x16xf32> to vector<16x16xf32>
    %121 = vector.shape_cast %120 : vector<16x16xf32> to vector<1x16x16xf32>
    %122 = vector.broadcast %118 : vector<8x1x1xf32> to vector<8x16x16xf32>
    %123 = vector.broadcast %121 : vector<1x16x16xf32> to vector<8x16x16xf32>
    %124 = arith.mulf %122, %123 : vector<8x16x16xf32>
    %125 = arith.addf %117, %124 : vector<8x16x16xf32>
    %cst_32 = arith.constant -1.000000e+10 : f32
    %126 = vector.shape_cast %4 : vector<1x16x16xi1> to vector<1x16x16xi1>
    %127 = vector.broadcast %126 : vector<1x16x16xi1> to vector<8x16x16xi1>
    %128 = vector.broadcast %cst_32 : f32 to vector<8x16x16xf32>
    %129 = arith.select %127, %125, %128 : vector<8x16x16xi1>, vector<8x16x16xf32>
    %cst_33 = arith.constant dense<0xFF800000> : vector<8x16xf32>
    %130 = vector.multi_reduction <maximumf>, %129, %cst_33 [2] : vector<8x16x16xf32> to vector<8x16xf32>
    %131 = vector.shape_cast %130 : vector<8x16xf32> to vector<8x16x1xf32>
    %132 = vector.broadcast %131 : vector<8x16x1xf32> to vector<8x16x16xf32>
    %133 = arith.subf %129, %132 : vector<8x16x16xf32>
    %134 = math.exp %133 : vector<8x16x16xf32>
    %cst_34 = arith.constant dense<0.000000e+00> : vector<8x16xf32>
    %135 = vector.multi_reduction <add>, %134, %cst_34 [2] : vector<8x16x16xf32> to vector<8x16xf32>
    %136 = vector.shape_cast %135 : vector<8x16xf32> to vector<8x16x1xf32>
    %137 = tpu.reciprocal %136 {approx = true} : vector<8x16x1xf32> -> vector<8x16x1xf32>
    %138 = vector.broadcast %137 : vector<8x16x1xf32> to vector<8x16x16xf32>
    %139 = arith.mulf %134, %138 : vector<8x16x16xf32>
    %cst_35 = arith.constant 0.000000e+00 : f32
    %140 = vector.shape_cast %4 : vector<1x16x16xi1> to vector<1x16x16xi1>
    %141 = vector.broadcast %140 : vector<1x16x16xi1> to vector<8x16x16xi1>
    %142 = vector.broadcast %cst_35 : f32 to vector<8x16x16xf32>
    %143 = arith.select %141, %139, %142 : vector<8x16x16xi1>, vector<8x16x16xf32>
    %144 = vector.shape_cast %92 : vector<8x16xf32> to vector<8x1x16xf32>
    %145 = vector.shape_cast %93 : vector<8x16xf32> to vector<8x1x16xf32>
    %146 = vector.shape_cast %10 : vector<1x16x16xi1> to vector<1x16x16xi1>
    %147 = vector.broadcast %146 : vector<1x16x16xi1> to vector<8x16x16xi1>
    %148 = vector.shape_cast %144 : vector<8x1x16xf32> to vector<8x1x16xf32>
    %149 = vector.broadcast %148 : vector<8x1x16xf32> to vector<8x16x16xf32>
    %150 = vector.shape_cast %145 : vector<8x1x16xf32> to vector<8x1x16xf32>
    %151 = vector.broadcast %150 : vector<8x1x16xf32> to vector<8x16x16xf32>
    %152 = arith.select %147, %149, %151 : vector<8x16x16xi1>, vector<8x16x16xf32>
    %153 = arith.mulf %143, %152 : vector<8x16x16xf32>
    %cst_36 = arith.constant dense<0.000000e+00> : vector<8x16xf32>
    %154 = vector.multi_reduction <add>, %153, %cst_36 [2] : vector<8x16x16xf32> to vector<8x16xf32>
    %c0_37 = arith.constant 0 : index
    %c0_38 = arith.constant 0 : index
    %155 = vector.load %arg10[%c0_37, %c0_38] : memref<8x1xf32, #tpu.memory_space<vmem>>, vector<8x1xf32>
    %156 = vector.broadcast %155 : vector<8x1xf32> to vector<8x16xf32>
    %157 = arith.mulf %154, %156 : vector<8x16xf32>
    %c0_39 = arith.constant 0 : index
    %c0_40 = arith.constant 0 : index
    %158 = vector.load %arg11[%c0_39, %c0_40] : memref<8x1xf32, #tpu.memory_space<vmem>>, vector<8x1xf32>
    %159 = vector.broadcast %158 : vector<8x1xf32> to vector<8x16xf32>
    %160 = arith.addf %157, %159 : vector<8x16xf32>
    %cst_41 = arith.constant 0.000000e+00 : f32
    %161 = vector.broadcast %cst_41 : f32 to vector<8x16xf32>
    %162 = arith.cmpf ogt, %160, %161 : vector<8x16xf32>
    %163 = math.exp %160 : vector<8x16xf32>
    %cst_42 = arith.constant 1.000000e+00 : f32
    %164 = vector.broadcast %cst_42 : f32 to vector<8x16xf32>
    %165 = arith.subf %163, %164 : vector<8x16xf32>
    %166 = arith.select %162, %160, %165 : vector<8x16xi1>, vector<8x16xf32>
    %c0_43 = arith.constant 0 : index
    %c0_44 = arith.constant 0 : index
    %c0_45 = arith.constant 0 : index
    %167 = vector.load %arg12[%c0_43, %c0_44, %c0_45] : memref<1x8x16xf32, #tpu.memory_space<vmem>>, vector<1x8x16xf32>
    %168 = vector.shape_cast %167 : vector<1x8x16xf32> to vector<8x16xf32>
    %169 = vector.shape_cast %166 : vector<8x16xf32> to vector<1x8x16xf32>
    tpu.vector_store %arg12[%c0_43, %c0_44, %c0_45], %169 {strides = array<i32>} : memref<1x8x16xf32, #tpu.memory_space<vmem>>, vector<1x8x16xf32>,
    return
  }
  func.func @transform_0(%arg0: i32) -> (i32, i32, i32) {
    %c0_i32 = arith.constant 0 : i32
    %c0_i32_0 = arith.constant 0 : i32
    %c0_i32_1 = arith.constant 0 : i32
    return %arg0, %c0_i32, %c0_i32_0 : i32, i32, i32
  }
  func.func @transform_1(%arg0: i32) -> (i32, i32, i32, i32) {
    %c0_i32 = arith.constant 0 : i32
    %c0_i32_0 = arith.constant 0 : i32
    %c0_i32_1 = arith.constant 0 : i32
    %c0_i32_2 = arith.constant 0 : i32
    return %arg0, %c0_i32, %c0_i32_0, %c0_i32_1 : i32, i32, i32, i32
  }
  func.func @transform_2(%arg0: i32) -> (i32, i32, i32) {
    %c0_i32 = arith.constant 0 : i32
    %c0_i32_0 = arith.constant 0 : i32
    %c0_i32_1 = arith.constant 0 : i32
    return %arg0, %c0_i32, %c0_i32_0 : i32, i32, i32
  }
  func.func @transform_3(%arg0: i32) -> (i32, i32, i32) {
    %c0_i32 = arith.constant 0 : i32
    %c0_i32_0 = arith.constant 0 : i32
    %c0_i32_1 = arith.constant 0 : i32
    %c0_i32_2 = arith.constant 0 : i32
    return %c0_i32, %c0_i32_0, %c0_i32_1 : i32, i32, i32
  }
  func.func @transform_4(%arg0: i32) -> (i32, i32) {
    %c0_i32 = arith.constant 0 : i32
    %c0_i32_0 = arith.constant 0 : i32
    %c0_i32_1 = arith.constant 0 : i32
    return %c0_i32, %c0_i32_0 : i32, i32
  }
  func.func @transform_5(%arg0: i32) -> (i32, i32) {
    %c0_i32 = arith.constant 0 : i32
    %c0_i32_0 = arith.constant 0 : i32
    %c0_i32_1 = arith.constant 0 : i32
    return %c0_i32, %c0_i32_0 : i32, i32
  }
  func.func @transform_6(%arg0: i32) -> (i32, i32) {
    %c0_i32 = arith.constant 0 : i32
    %c0_i32_0 = arith.constant 0 : i32
    %c0_i32_1 = arith.constant 0 : i32
    return %c0_i32, %c0_i32_0 : i32, i32
  }
  func.func @transform_7(%arg0: i32) -> (i32, i32, i32) {
    %c0_i32 = arith.constant 0 : i32
    %c0_i32_0 = arith.constant 0 : i32
    %c0_i32_1 = arith.constant 0 : i32
    %c0_i32_2 = arith.constant 0 : i32
    return %c0_i32, %c0_i32_0, %c0_i32_1 : i32, i32, i32
  }
  func.func @transform_8(%arg0: i32) -> (i32, i32) {
    %c0_i32 = arith.constant 0 : i32
    %c0_i32_0 = arith.constant 0 : i32
    %c0_i32_1 = arith.constant 0 : i32
    return %c0_i32, %c0_i32_0 : i32, i32
  }
  func.func @transform_9(%arg0: i32) -> (i32, i32) {
    %c0_i32 = arith.constant 0 : i32
    %c0_i32_0 = arith.constant 0 : i32
    %c0_i32_1 = arith.constant 0 : i32
    return %c0_i32, %c0_i32_0 : i32, i32
  }
  func.func @transform_10(%arg0: i32) -> (i32, i32) {
    %c0_i32 = arith.constant 0 : i32
    %c0_i32_0 = arith.constant 0 : i32
    %c0_i32_1 = arith.constant 0 : i32
    return %c0_i32, %c0_i32_0 : i32, i32
  }
  func.func @transform_11(%arg0: i32) -> (i32, i32, i32) {
    %c0_i32 = arith.constant 0 : i32
    %c0_i32_0 = arith.constant 0 : i32
    %c0_i32_1 = arith.constant 0 : i32
    return %arg0, %c0_i32, %c0_i32_0 : i32, i32, i32
  }
}

</mosaic_0001>

<llo_original>
// kernel: tpu_custom_call.1
$region0: #{tpu_custom_call.1}
  #allocation0 [shape = 'u32[]', space=smem, size = 0x4, offset = 0x4, fixed_abs, tag = 'smem constant byte address 0x4 - core index']
  #allocation1 [shape = 'u32[72,128]{1,0:T(1,128)}', space=vmem, size = 0x9000, scoped, tag = 'internal scratch']
  %s0 = inlined_call_operand.vmem [shape: f32[2,16,16], index: 0, kind: input, shape index: {}]
  %s1 = inlined_call_operand.hbm [shape: f32[2,4,16,16], index: 1, kind: input, shape index: {}]
  %s2 = inlined_call_operand.vmem [shape: f32[2,4,16], index: 2, kind: input, shape index: {}]
  %s3 = inlined_call_operand.vmem [shape: f32[8,1,4], index: 3, kind: input, shape index: {}]
  %s4 = inlined_call_operand.vmem [shape: f32[16,4], index: 4, kind: input, shape index: {}]
  %s5 = inlined_call_operand.vmem [shape: f32[8,1], index: 5, kind: input, shape index: {}]
  %s6 = inlined_call_operand.vmem [shape: f32[8,1], index: 6, kind: input, shape index: {}]
  %s7 = inlined_call_operand.vmem [shape: f32[8,1,4], index: 7, kind: input, shape index: {}]
  %s8 = inlined_call_operand.vmem [shape: f32[16,8], index: 8, kind: input, shape index: {}]
  %s9 = inlined_call_operand.vmem [shape: f32[8,1], index: 9, kind: input, shape index: {}]
  %s10 = inlined_call_operand.vmem [shape: f32[8,1], index: 10, kind: input, shape index: {}]
  %s11 = inlined_call_operand.hbm [shape: f32[2,8,16], index: 11, kind: output, shape index: {}]
  %s12 = sld [smem:[#allocation0]]
  $region81: #{tpu_custom_call.1} parent=0
    _
  %s14 = ssub.s32 1, %s12
  %s15 = scalar_select 0, %s14, %s12
  $region1: #{tpu_custom_call.1} parent=0
    #allocation2 [shape = 'u8[65536]{0}', space=vmem, size = 0x10000, scoped, tag = 'input window, operand 1']
    #allocation3 [shape = 's32[2]{0}', space=sflag, size = 0x8, scoped, tag = 'scoped memory for tpu_custom_call.1']
    #allocation4 [shape = 's32[2]{0}', space=sflag, size = 0x8, scoped, tag = 'scoped memory for tpu_custom_call.1']
    #allocation5 [shape = 'u8[8192]{0}', space=vmem, size = 0x2000, scoped, tag = 'output window, operand 0']
    %16 = vsyncpa [#allocation3], 0
    %s17 = scalar_lea.sflag [#allocation3], 1
    %18 = vsyncpa %s17, 0
    %19 = vsyncpa [#allocation4], 0
    %s20 = scalar_lea.sflag [#allocation4], 1
    %21 = vsyncpa %s20, 0
    loop: start=0, step=1, limit=4
    $region2: #{tpu_custom_call.1} parent=1 // loop_pre_header
      _
    $region3: #{tpu_custom_call.1} parent=1 // loop_header
      %s23 = sphi 0, %s27
      %p24 = scmp.ge.s32.totalorder %s23, 4
      %s33 = sphi 0, %s35
      %s36 = sphi 0, %s33
      %s37 = sphi 0, %s36
      %s53 = sphi 0, %s37
      %s59 = sphi 0, %s61
      %s62 = sphi 0, %s59
      %s63 = sphi 0, %s62
      %s79 = sphi 0, %s63
      %s85 = sphi 0, %s87
      %s88 = sphi 0, %s85
      %s89 = sphi 0, %s88
      %s105 = sphi 0, %s89
      %s109 = sphi 0, %s109
      %s111 = sphi 0, %s109
      %s112 = sphi 0, %s111
      %s126 = sphi 0, %s112
      %s130 = sphi 0, %s130
      %s132 = sphi 0, %s130
      %s133 = sphi 0, %s132
      %s147 = sphi 0, %s133
      %s151 = sphi 0, %s151
      %s153 = sphi 0, %s151
      %s154 = sphi 0, %s153
      %s168 = sphi 0, %s154
      %s172 = sphi 0, %s172
      %s174 = sphi 0, %s172
      %s175 = sphi 0, %s174
      %s189 = sphi 0, %s175
      %s193 = sphi 0, %s193
      %s195 = sphi 0, %s193
      %s196 = sphi 0, %s195
      %s210 = sphi 0, %s196
      %s214 = sphi 0, %s214
      %s216 = sphi 0, %s214
      %s217 = sphi 0, %s216
      %s231 = sphi 0, %s217
      %s235 = sphi 0, %s235
      %s237 = sphi 0, %s235
      %s238 = sphi 0, %s237
      %s252 = sphi 0, %s238
      %s256 = sphi 0, %s256
      %s258 = sphi 0, %s256
      %s259 = sphi 0, %s258
      %s273 = sphi 0, %s259
      %s279 = sphi 0, %s281
      %s282 = sphi 0, %s279
      %s283 = sphi 0, %s282
      %s299 = sphi 0, %s283
    $region4: #{tpu_custom_call.1} parent=1 // loop_header_branch
      %26 = sbr.rel (%p24) target = $region8
    $region5: #{tpu_custom_call.1} parent=1 // loop_body
      %s28 = ssub.s32 %s23, 1
      %s29 = ssub.s32 %s23, 2
      %s30 = sadd.s32 %s23, 1
      %s31 = ssub.s32 %s23, %s30
      %p32 = scmp.eq.s32.totalorder %s31, 0
      %s34 = sadd.s32 %s33, 1
      %s35 = scalar_select %p32, %s33, %s34
      %p38 = pneg %p32
      %p39 = scmp.eq.s32.totalorder %s23, 1
      %p40 = por %p38, %p39
      %p41 = scmp.ne.s32.totalorder %s33, %s36
      %p42 = scmp.eq.s32.totalorder %s23, 0
      %p43 = por %p41, %p42
      %p44 = scmp.ne.s32.totalorder %s33, %s36
      %p45 = scmp.eq.s32.totalorder %s28, 1
      %p46 = por %p44, %p45
      %p47 = scmp.ne.s32.totalorder %s36, %s37
      %p48 = scmp.eq.s32.totalorder %s28, 0
      %p49 = por %p47, %p48
      %p50 = scmp.ne.s32.totalorder %s36, %s37
      %p51 = scmp.eq.s32.totalorder %s29, 1
      %p52 = por %p50, %p51
      %p54 = scmp.ne.s32.totalorder %s37, %s53
      %p55 = scmp.eq.s32.totalorder %s29, 0
      %p56 = por %p54, %p55
      %s57 = ssub.s32 %s23, %s30
      %p58 = scmp.eq.s32.totalorder %s57, 0
      %s60 = sadd.s32 %s59, 1
      %s61 = scalar_select %p58, %s59, %s60
      %p64 = pneg %p58
      %p65 = scmp.eq.s32.totalorder %s23, 1
      %p66 = por %p64, %p65
      %p67 = scmp.ne.s32.totalorder %s59, %s62
      %p68 = scmp.eq.s32.totalorder %s23, 0
      %p69 = por %p67, %p68
      %p70 = scmp.ne.s32.totalorder %s59, %s62
      %p71 = scmp.eq.s32.totalorder %s28, 1
      %p72 = por %p70, %p71
      %p73 = scmp.ne.s32.totalorder %s62, %s63
      %p74 = scmp.eq.s32.totalorder %s28, 0
      %p75 = por %p73, %p74
      %p76 = scmp.ne.s32.totalorder %s62, %s63
      %p77 = scmp.eq.s32.totalorder %s29, 1
      %p78 = por %p76, %p77
      %p80 = scmp.ne.s32.totalorder %s63, %s79
      %p81 = scmp.eq.s32.totalorder %s29, 0
      %p82 = por %p80, %p81
      %s83 = ssub.s32 %s23, %s30
      %p84 = scmp.eq.s32.totalorder %s83, 0
      %s86 = sadd.s32 %s85, 1
      %s87 = scalar_select %p84, %s85, %s86
      %p90 = pneg %p84
      %p91 = scmp.eq.s32.totalorder %s23, 1
      %p92 = por %p90, %p91
      %p93 = scmp.ne.s32.totalorder %s85, %s88
      %p94 = scmp.eq.s32.totalorder %s23, 0
      %p95 = por %p93, %p94
      %p96 = scmp.ne.s32.totalorder %s85, %s88
      %p97 = scmp.eq.s32.totalorder %s28, 1
      %p98 = por %p96, %p97
      %p99 = scmp.ne.s32.totalorder %s88, %s89
      %p100 = scmp.eq.s32.totalorder %s28, 0
      %p101 = por %p99, %p100
      %p102 = scmp.ne.s32.totalorder %s88, %s89
      %p103 = scmp.eq.s32.totalorder %s29, 1
      %p104 = por %p102, %p103
      %p106 = scmp.ne.s32.totalorder %s89, %s105
      %p107 = scmp.eq.s32.totalorder %s29, 0
      %p108 = por %p106, %p107
      %s110 = sadd.s32 %s109, 1
      %p113 = scmp.eq.s32.totalorder %s23, 1
      %p114 = scmp.ne.s32.totalorder %s109, %s111
      %p115 = scmp.eq.s32.totalorder %s23, 0
      %p116 = por %p114, %p115
      %p117 = scmp.ne.s32.totalorder %s109, %s111
      %p118 = scmp.eq.s32.totalorder %s28, 1
      %p119 = por %p117, %p118
      %p120 = scmp.ne.s32.totalorder %s111, %s112
      %p121 = scmp.eq.s32.totalorder %s28, 0
      %p122 = por %p120, %p121
      %p123 = scmp.ne.s32.totalorder %s111, %s112
      %p124 = scmp.eq.s32.totalorder %s29, 1
      %p125 = por %p123, %p124
      %p127 = scmp.ne.s32.totalorder %s112, %s126
      %p128 = scmp.eq.s32.totalorder %s29, 0
      %p129 = por %p127, %p128
      %s131 = sadd.s32 %s130, 1
      %p134 = scmp.eq.s32.totalorder %s23, 1
      %p135 = scmp.ne.s32.totalorder %s130, %s132
      %p136 = scmp.eq.s32.totalorder %s23, 0
      %p137 = por %p135, %p136
      %p138 = scmp.ne.s32.totalorder %s130, %s132
      %p139 = scmp.eq.s32.totalorder %s28, 1
      %p140 = por %p138, %p139
      %p141 = scmp.ne.s32.totalorder %s132, %s133
      %p142 = scmp.eq.s32.totalorder %s28, 0
      %p143 = por %p141, %p142
      %p144 = scmp.ne.s32.totalorder %s132, %s133
      %p145 = scmp.eq.s32.totalorder %s29, 1
      %p146 = por %p144, %p145
      %p148 = scmp.ne.s32.totalorder %s133, %s147
      %p149 = scmp.eq.s32.totalorder %s29, 0
      %p150 = por %p148, %p149
      %s152 = sadd.s32 %s151, 1
      %p155 = scmp.eq.s32.totalorder %s23, 1
      %p156 = scmp.ne.s32.totalorder %s151, %s153
      %p157 = scmp.eq.s32.totalorder %s23, 0
      %p158 = por %p156, %p157
      %p159 = scmp.ne.s32.totalorder %s151, %s153
      %p160 = scmp.eq.s32.totalorder %s28, 1
      %p161 = por %p159, %p160
      %p162 = scmp.ne.s32.totalorder %s153, %s154
      %p163 = scmp.eq.s32.totalorder %s28, 0
      %p164 = por %p162, %p163
      %p165 = scmp.ne.s32.totalorder %s153, %s154
      %p166 = scmp.eq.s32.totalorder %s29, 1
      %p167 = por %p165, %p166
      %p169 = scmp.ne.s32.totalorder %s154, %s168
      %p170 = scmp.eq.s32.totalorder %s29, 0
      %p171 = por %p169, %p170
      %s173 = sadd.s32 %s172, 1
      %p176 = scmp.eq.s32.totalorder %s23, 1
      %p177 = scmp.ne.s32.totalorder %s172, %s174
      %p178 = scmp.eq.s32.totalorder %s23, 0
      %p179 = por %p177, %p178
      %p180 = scmp.ne.s32.totalorder %s172, %s174
      %p181 = scmp.eq.s32.totalorder %s28, 1
      %p182 = por %p180, %p181
      %p183 = scmp.ne.s32.totalorder %s174, %s175
      %p184 = scmp.eq.s32.totalorder %s28, 0
      %p185 = por %p183, %p184
      %p186 = scmp.ne.s32.totalorder %s174, %s175
      %p187 = scmp.eq.s32.totalorder %s29, 1
      %p188 = por %p186, %p187
      %p190 = scmp.ne.s32.totalorder %s175, %s189
      %p191 = scmp.eq.s32.totalorder %s29, 0
      %p192 = por %p190, %p191
      %s194 = sadd.s32 %s193, 1
      %p197 = scmp.eq.s32.totalorder %s23, 1
      %p198 = scmp.ne.s32.totalorder %s193, %s195
      %p199 = scmp.eq.s32.totalorder %s23, 0
      %p200 = por %p198, %p199
      %p201 = scmp.ne.s32.totalorder %s193, %s195
      %p202 = scmp.eq.s32.totalorder %s28, 1
      %p203 = por %p201, %p202
      %p204 = scmp.ne.s32.totalorder %s195, %s196
      %p205 = scmp.eq.s32.totalorder %s28, 0
      %p206 = por %p204, %p205
      %p207 = scmp.ne.s32.totalorder %s195, %s196
      %p208 = scmp.eq.s32.totalorder %s29, 1
      %p209 = por %p207, %p208
      %p211 = scmp.ne.s32.totalorder %s196, %s210
      %p212 = scmp.eq.s32.totalorder %s29, 0
      %p213 = por %p211, %p212
      %s215 = sadd.s32 %s214, 1
      %p218 = scmp.eq.s32.totalorder %s23, 1
      %p219 = scmp.ne.s32.totalorder %s214, %s216
      %p220 = scmp.eq.s32.totalorder %s23, 0
      %p221 = por %p219, %p220
      %p222 = scmp.ne.s32.totalorder %s214, %s216
      %p223 = scmp.eq.s32.totalorder %s28, 1
      %p224 = por %p222, %p223
      %p225 = scmp.ne.s32.totalorder %s216, %s217
      %p226 = scmp.eq.s32.totalorder %s28, 0
      %p227 = por %p225, %p226
      %p228 = scmp.ne.s32.totalorder %s216, %s217
      %p229 = scmp.eq.s32.totalorder %s29, 1
      %p230 = por %p228, %p229
      %p232 = scmp.ne.s32.totalorder %s217, %s231
      %p233 = scmp.eq.s32.totalorder %s29, 0
      %p234 = por %p232, %p233
      %s236 = sadd.s32 %s235, 1
      %p239 = scmp.eq.s32.totalorder %s23, 1
      %p240 = scmp.ne.s32.totalorder %s235, %s237
      %p241 = scmp.eq.s32.totalorder %s23, 0
      %p242 = por %p240, %p241
      %p243 = scmp.ne.s32.totalorder %s235, %s237
      %p244 = scmp.eq.s32.totalorder %s28, 1
      %p245 = por %p243, %p244
      %p246 = scmp.ne.s32.totalorder %s237, %s238
      %p247 = scmp.eq.s32.totalorder %s28, 0
      %p248 = por %p246, %p247
      %p249 = scmp.ne.s32.totalorder %s237, %s238
      %p250 = scmp.eq.s32.totalorder %s29, 1
      %p251 = por %p249, %p250
      %p253 = scmp.ne.s32.totalorder %s238, %s252
      %p254 = scmp.eq.s32.totalorder %s29, 0
      %p255 = por %p253, %p254
      %s257 = sadd.s32 %s256, 1
      %p260 = scmp.eq.s32.totalorder %s23, 1
      %p261 = scmp.ne.s32.totalorder %s256, %s258
      %p262 = scmp.eq.s32.totalorder %s23, 0
      %p263 = por %p261, %p262
      %p264 = scmp.ne.s32.totalorder %s256, %s258
      %p265 = scmp.eq.s32.totalorder %s28, 1
      %p266 = por %p264, %p265
      %p267 = scmp.ne.s32.totalorder %s258, %s259
      %p268 = scmp.eq.s32.totalorder %s28, 0
      %p269 = por %p267, %p268
      %p270 = scmp.ne.s32.totalorder %s258, %s259
      %p271 = scmp.eq.s32.totalorder %s29, 1
      %p272 = por %p270, %p271
      %p274 = scmp.ne.s32.totalorder %s259, %s273
      %p275 = scmp.eq.s32.totalorder %s29, 0
      %p276 = por %p274, %p275
      %s277 = ssub.s32 %s23, %s30
      %p278 = scmp.eq.s32.totalorder %s277, 0
      %s280 = sadd.s32 %s279, 1
      %s281 = scalar_select %p278, %s279, %s280
      %p284 = pneg %p278
      %p285 = scmp.eq.s32.totalorder %s23, 1
      %p286 = por %p284, %p285
      %p287 = scmp.ne.s32.totalorder %s279, %s282
      %p288 = scmp.eq.s32.totalorder %s23, 0
      %p289 = por %p287, %p288
      %p290 = scmp.ne.s32.totalorder %s279, %s282
      %p291 = scmp.eq.s32.totalorder %s28, 1
      %p292 = por %p290, %p291
      %p293 = scmp.ne.s32.totalorder %s282, %s283
      %p294 = scmp.eq.s32.totalorder %s28, 0
      %p295 = por %p293, %p294
      %p296 = scmp.ne.s32.totalorder %s282, %s283
      %p297 = scmp.eq.s32.totalorder %s29, 1
      %p298 = por %p296, %p297
      %p300 = scmp.ne.s32.totalorder %s283, %s299
      %p301 = scmp.eq.s32.totalorder %s29, 0
      %p302 = por %p300, %p301
      %p303 = scmp.le.s32.totalorder 1, %s23
      %p304 = scmp.lt.s32.totalorder %s23, 3
      %p305 = pnand %p303, %p304
      %p306 = pneg %p305
      // Predicated region
      $region9: #{tpu_custom_call.1} parent=5 // pred_check
        _
      $region10: #{tpu_custom_call.1} parent=5 // pred_check_branch
        %308 = sbr.rel (%p305) target = $region12
      $region11: #{tpu_custom_call.1} parent=5 // pred_region
        %s309 = ssub.s32 %s23, 1
        // Predicated region
        $region13: #{tpu_custom_call.1} parent=11 // pred_check
          %p310 = pneg %p122
        $region14: #{tpu_custom_call.1} parent=11 // pred_check_branch
          %312 = sbr.rel (%p310) target = $region16
        $region15: #{tpu_custom_call.1} parent=11 // pred_region
          _
        $region16: #{tpu_custom_call.1} parent=11 // pred_fallthru
          _
        // Predicated region
        $region17: #{tpu_custom_call.1} parent=11 // pred_check
          %p313 = pneg %p143
        $region18: #{tpu_custom_call.1} parent=11 // pred_check_branch
          %315 = sbr.rel (%p313) target = $region20
        $region19: #{tpu_custom_call.1} parent=11 // pred_region
          _
        $region20: #{tpu_custom_call.1} parent=11 // pred_fallthru
          _
        // Predicated region
        $region21: #{tpu_custom_call.1} parent=11 // pred_check
          %p316 = pneg %p164
        $region22: #{tpu_custom_call.1} parent=11 // pred_check_branch
          %318 = sbr.rel (%p316) target = $region24
        $region23: #{tpu_custom_call.1} parent=11 // pred_region
          _
        $region24: #{tpu_custom_call.1} parent=11 // pred_fallthru
          _
        // Predicated region
        $region25: #{tpu_custom_call.1} parent=11 // pred_check
          %p319 = pneg %p185
        $region26: #{tpu_custom_call.1} parent=11 // pred_check_branch
          %321 = sbr.rel (%p319) target = $region28
        $region27: #{tpu_custom_call.1} parent=11 // pred_region
          _
        $region28: #{tpu_custom_call.1} parent=11 // pred_fallthru
          _
        // Predicated region
        $region29: #{tpu_custom_call.1} parent=11 // pred_check
          %p322 = pneg %p206
        $region30: #{tpu_custom_call.1} parent=11 // pred_check_branch
          %324 = sbr.rel (%p322) target = $region32
        $region31: #{tpu_custom_call.1} parent=11 // pred_region
          _
        $region32: #{tpu_custom_call.1} parent=11 // pred_fallthru
          _
        // Predicated region
        $region33: #{tpu_custom_call.1} parent=11 // pred_check
          %p325 = pneg %p227
        $region34: #{tpu_custom_call.1} parent=11 // pred_check_branch
          %327 = sbr.rel (%p325) target = $region36
        $region35: #{tpu_custom_call.1} parent=11 // pred_region
          _
        $region36: #{tpu_custom_call.1} parent=11 // pred_fallthru
          _
        // Predicated region
        $region37: #{tpu_custom_call.1} parent=11 // pred_check
          %p328 = pneg %p248
        $region38: #{tpu_custom_call.1} parent=11 // pred_check_branch
          %330 = sbr.rel (%p328) target = $region40
        $region39: #{tpu_custom_call.1} parent=11 // pred_region
          _
        $region40: #{tpu_custom_call.1} parent=11 // pred_fallthru
          _
        // Predicated region
        $region41: #{tpu_custom_call.1} parent=11 // pred_check
          %p331 = pneg %p269
        $region42: #{tpu_custom_call.1} parent=11 // pred_check_branch
          %333 = sbr.rel (%p331) target = $region44
        $region43: #{tpu_custom_call.1} parent=11 // pred_region
          _
        $region44: #{tpu_custom_call.1} parent=11 // pred_fallthru
          _
      $region12: #{tpu_custom_call.1} parent=5 // pred_fallthru
        _
      %p334 = scmp.lt.s32.totalorder %s23, 2
      // Predicated region
      $region45: #{tpu_custom_call.1} parent=5 // pred_check
        %p335 = pneg %p334
      $region46: #{tpu_custom_call.1} parent=5 // pred_check_branch
        %337 = sbr.rel (%p335) target = $region48
      $region47: #{tpu_custom_call.1} parent=5 // pred_region
        // Predicated region
        $region49: #{tpu_custom_call.1} parent=47 // pred_check
          %p338 = pneg %p43
        $region50: #{tpu_custom_call.1} parent=47 // pred_check_branch
          %340 = sbr.rel (%p338) target = $region52
        $region51: #{tpu_custom_call.1} parent=47 // pred_region
          %p341 = scmp.lt.s32.totalorder %s23, 1
          %s342 = scalar_select %p341, %s23, 1
          %s343 = smul.addr %s342, 2
          %s344 = smul.addr %s343, 8
          %s345 = scalar_lea.vmem %s0, %s344
        $region52: #{tpu_custom_call.1} parent=47 // pred_fallthru
          _
        // Predicated region
        $region53: #{tpu_custom_call.1} parent=47 // pred_check
          %p346 = pneg %p69
        $region54: #{tpu_custom_call.1} parent=47 // pred_check_branch
          %348 = sbr.rel (%p346) target = $region56
        $region55: #{tpu_custom_call.1} parent=47 // pred_region
          %s349 = sand.u32 %s59, 1
          %s350 = scalar_lea.sflag [#allocation3], %s349
          %s351 = sand.u32 %s59, 1
          %s352 = smul.addr %s351, 64
          %s353 = scalar_lea.vmem [#allocation2], %s352
          %355 = vsyncadd %s350, 0
          %s356 = smul.addr %s23, 8
          %s357 = smul.addr %s356, 8
          %s358 = scalar_lea.hbm %s1, %s357
          %s359 = sshll.u32 %s358, 4
          %s360 = int_to_ptr.hbm [resolvable:$true] %s359
          %s361 = sshll.u32 %s353, 4
          %s362 = int_to_ptr.vmem [resolvable:$true] %s361
          %367 = dma.hbm_to_vmem [thread:$0]  %s360, 1024, %s362, %s350, 128, 128, 8
        $region56: #{tpu_custom_call.1} parent=47 // pred_fallthru
          _
        // Predicated region
        $region57: #{tpu_custom_call.1} parent=47 // pred_check
          %p368 = pneg %p95
        $region58: #{tpu_custom_call.1} parent=47 // pred_check_branch
          %370 = sbr.rel (%p368) target = $region60
        $region59: #{tpu_custom_call.1} parent=47 // pred_region
          %p371 = scmp.lt.s32.totalorder %s23, 1
          %s372 = scalar_select %p371, %s23, 1
          %s373 = smul.addr %s372, 4
          %s374 = scalar_lea.vmem %s2, %s373
        $region60: #{tpu_custom_call.1} parent=47 // pred_fallthru
          _
      $region48: #{tpu_custom_call.1} parent=5 // pred_fallthru
        _
      %p375 = scmp.le.s32.totalorder 1, %s23
      %p376 = scmp.lt.s32.totalorder %s23, 3
      %p377 = pnand %p375, %p376
      %p378 = pneg %p377
      // Predicated region
      $region61: #{tpu_custom_call.1} parent=5 // pred_check
        _
      $region62: #{tpu_custom_call.1} parent=5 // pred_check_branch
        %380 = sbr.rel (%p377) target = $region64
      $region63: #{tpu_custom_call.1} parent=5 // pred_region
        %s381 = ssub.s32 %s23, 1
        %s382 = sand.u32 %s62, 1
        %s383 = scalar_lea.sflag [#allocation3], %s382
        %s384 = sand.u32 %s62, 1
        %s385 = smul.addr %s384, 64
        %s386 = scalar_lea.vmem [#allocation2], %s385
        // Predicated region
        $region65: #{tpu_custom_call.1} parent=63 // pred_check
          %p387 = pneg %p75
        $region66: #{tpu_custom_call.1} parent=63 // pred_check_branch
          %389 = sbr.rel (%p387) target = $region68
        $region67: #{tpu_custom_call.1} parent=63 // pred_region
          %391 = dma.done %s383, 1024
        $region68: #{tpu_custom_call.1} parent=63 // pred_fallthru
          _
        %p392 = scmp.lt.s32.totalorder %s28, 1
        %s393 = scalar_select %p392, %s28, 1
        %s394 = smul.addr %s393, 2
        %s395 = smul.addr %s394, 8
        %s396 = scalar_lea.vmem %s0, %s395
        %p397 = pneg %p49
        %p398 = pneg %p46
        %s399 = sand.u32 %s62, 1
        %s400 = scalar_lea.sflag [#allocation3], %s399
        %s401 = sand.u32 %s62, 1
        %s402 = smul.addr %s401, 64
        %s403 = scalar_lea.vmem [#allocation2], %s402
        %p404 = pneg %p75
        %p405 = pneg %p72
        %p406 = scmp.lt.s32.totalorder %s28, 1
        %s407 = scalar_select %p406, %s28, 1
        %s408 = smul.addr %s407, 4
        %s409 = scalar_lea.vmem %s2, %s408
        %p410 = pneg %p101
        %p411 = pneg %p98
        %p412 = pneg %p122
        %p413 = pneg %p119
        %p414 = pneg %p143
        %p415 = pneg %p140
        %p416 = pneg %p164
        %p417 = pneg %p161
        %p418 = pneg %p185
        %p419 = pneg %p182
        %p420 = pneg %p206
        %p421 = pneg %p203
        %p422 = pneg %p227
        %p423 = pneg %p224
        %p424 = pneg %p248
        %p425 = pneg %p245
        %p426 = pneg %p269
        %p427 = pneg %p266
        %p428 = pneg %p295
        %p429 = pneg %p292
        %s430 = sand.u32 %s282, 1
        %s431 = scalar_lea.sflag [#allocation4], %s430
        %s432 = sand.u32 %s282, 1
        %s433 = smul.addr %s432, 8
        %s434 = scalar_lea.vmem [#allocation5], %s433
        %p435 = scmp.lt.s32.totalorder %s28, 1
        %s436 = scalar_select %p435, %s28, 1
        %s437 = smul.addr %s436, 2
        %s438 = smul.addr %s437, 8
        %s439 = scalar_lea.vmem %s0, %s438
        %p440 = scmp.lt.s32.totalorder %s28, 1
        %s441 = scalar_select %p440, %s28, 1
        %s442 = smul.addr %s441, 4
        %s443 = scalar_lea.vmem %s2, %s442
        %v444 = vld [vmem:[%s439] sm:$0xff]
        %v445 = vld [vmem:[%s439 + $0x8] sm:$0xff]
        %vm446 = vcmp.eq.f32.partialorder %v444, 1.0
        %vm447 = vcmp.eq.f32.partialorder %v445, 1.0
        %v448 = vld [vmem:[%s386] sm:$0xff]
        %v449 = vld [vmem:[%s386 + $0x8] sm:$0xff]
        %v450 = vld [vmem:[%s386 + $0x10] sm:$0xff]
        %v451 = vld [vmem:[%s386 + $0x18] sm:$0xff]
        %v452 = vld [vmem:[%s386 + $0x20] sm:$0xff]
        %v453 = vld [vmem:[%s386 + $0x28] sm:$0xff]
        %v454 = vld [vmem:[%s386 + $0x30] sm:$0xff]
        %v455 = vld [vmem:[%s386 + $0x38] sm:$0xff]
        %v456 = vlaneseq
        %v457 = vshrl.u32 %v456, 7
        %v458 = vadd.s32 %v457, 8
        %v459 = vlaneseq
        %v460 = vand.u32 %v459, 127
        %vm461 = vcmp.eq.s32.totalorder %v457, %v460
        %vm462 = vcmp.eq.s32.totalorder %v458, %v460
        %v463 = vld [vmem:[%s443] sm:$0xf]
        %v464 = vld [vmem:[%s4] sm:$0xff]
        %v465 = vld [vmem:[%s4 + $0x8] sm:$0xff]
        %vm466 = vcmask 31744
        %v468 = vsel %vm466, %v464, 0
        %v471 = vsel %vm466, %v465, 0
        %vm473 = vcmask 1043456
        %v475 = vsel %vm473, %v463, 0
        %477 = vmatpush.msra.mxu0 0.0
        %478 = vmatpush.msra.mxu0 0.0
        %479 = vmatpush.msra.mxu0 0.0
        %480 = vmatpush.msra.mxu0 0.0
        %481 = vmatpush.msra.mxu0 0.0
        %482 = vmatpush.msra.mxu0 0.0
        %483 = vmatpush.msra.mxu0 0.0
        %484 = vmatpush.msra.mxu0 0.0
        %485 = vmatpush.msra.mxu0 0.0
        %486 = vmatpush.msra.mxu0 0.0
        %487 = vmatpush.msra.mxu0 0.0
        %488 = vmatpush.msra.mxu0 0.0
        %489 = vmatpush.msra.mxu0 0.0
        %490 = vmatpush.msra.mxu0 0.0
        %491 = vmatpush.msra.mxu0 0.0
        %492 = vmatpush.msra.mxu0 %v475
        %493 = vmatmul.f32.gmra.mxu0 %v468
        %v494 = vpop.f32.mrf.mxu0
        %v495 = vadd.f32 0.0, %v494
        %496 = vmatmul.f32.gmra.mxu0 %v471
        %v497 = vpop.f32.mrf.mxu0
        %v498 = vadd.f32 0.0, %v497
        %499 = vdwg.mxu0
        %v500 = vld [vmem:[%s3] sm:$0x1]
        %v501 = vld [vmem:[%s3 + $0x1] sm:$0x1]
        %v502 = vld [vmem:[%s3 + $0x2] sm:$0x1]
        %v503 = vld [vmem:[%s3 + $0x3] sm:$0x1]
        %v504 = vld [vmem:[%s3 + $0x4] sm:$0x1]
        %v505 = vld [vmem:[%s3 + $0x5] sm:$0x1]
        %v506 = vld [vmem:[%s3 + $0x6] sm:$0x1]
        %v507 = vld [vmem:[%s3 + $0x7] sm:$0x1]
        %v516 = vperm.slane %v500, 0
        %v517 = vperm.slane %v501, 0
        %v518 = vperm.slane %v502, 0
        %v519 = vperm.slane %v503, 0
        %v520 = vperm.slane %v504, 0
        %v521 = vperm.slane %v505, 0
        %v522 = vperm.slane %v506, 0
        %v523 = vperm.slane %v507, 0
        %524 = vset.pattern.permute.xlu0 0
        %525 = vperm.xlu0 %524, %v516
        %v526 = vpop.permute.xlu0 %525
        %528 = vset.pattern.permute.xlu0 0
        %529 = vperm.xlu0 %528, %v517
        %v530 = vpop.permute.xlu0 %529
        %532 = vset.pattern.permute.xlu0 0
        %533 = vperm.xlu0 %532, %v518
        %v534 = vpop.permute.xlu0 %533
        %536 = vset.pattern.permute.xlu0 0
        %537 = vperm.xlu0 %536, %v519
        %v538 = vpop.permute.xlu0 %537
        %540 = vset.pattern.permute.xlu0 0
        %541 = vperm.xlu0 %540, %v520
        %v542 = vpop.permute.xlu0 %541
        %544 = vset.pattern.permute.xlu0 0
        %545 = vperm.xlu0 %544, %v521
        %v546 = vpop.permute.xlu0 %545
        %548 = vset.pattern.permute.xlu0 0
        %549 = vperm.xlu0 %548, %v522
        %v550 = vpop.permute.xlu0 %549
        %552 = vset.pattern.permute.xlu0 0
        %553 = vperm.xlu0 %552, %v523
        %v554 = vpop.permute.xlu0 %553
        %v556 = vmul.f32 %v526, %v448
        %v557 = vmul.f32 %v526, %v449
        %v558 = vmul.f32 %v530, %v448
        %v559 = vmul.f32 %v530, %v449
        %v560 = vmul.f32 %v534, %v448
        %v561 = vmul.f32 %v534, %v449
        %v562 = vmul.f32 %v538, %v448
        %v563 = vmul.f32 %v538, %v449
        %v564 = vmul.f32 %v542, %v448
        %v565 = vmul.f32 %v542, %v449
        %v566 = vmul.f32 %v546, %v448
        %v567 = vmul.f32 %v546, %v449
        %v568 = vmul.f32 %v550, %v448
        %v569 = vmul.f32 %v550, %v449
        %v570 = vmul.f32 %v554, %v448
        %v571 = vmul.f32 %v554, %v449
        %572 = vset.pattern.permute.xlu0 1
        %573 = vperm.xlu0 %572, %v516
        %v574 = vpop.permute.xlu0 %573
        %576 = vset.pattern.permute.xlu0 1
        %577 = vperm.xlu0 %576, %v517
        %v578 = vpop.permute.xlu0 %577
        %580 = vset.pattern.permute.xlu0 1
        %581 = vperm.xlu0 %580, %v518
        %v582 = vpop.permute.xlu0 %581
        %584 = vset.pattern.permute.xlu0 1
        %585 = vperm.xlu0 %584, %v519
        %v586 = vpop.permute.xlu0 %585
        %588 = vset.pattern.permute.xlu0 1
        %589 = vperm.xlu0 %588, %v520
        %v590 = vpop.permute.xlu0 %589
        %592 = vset.pattern.permute.xlu0 1
        %593 = vperm.xlu0 %592, %v521
        %v594 = vpop.permute.xlu0 %593
        %596 = vset.pattern.permute.xlu0 1
        %597 = vperm.xlu0 %596, %v522
        %v598 = vpop.permute.xlu0 %597
        %600 = vset.pattern.permute.xlu0 1
        %601 = vperm.xlu0 %600, %v523
        %v602 = vpop.permute.xlu0 %601
        %v604 = vmul.f32 %v574, %v450
        %v605 = vmul.f32 %v574, %v451
        %v606 = vmul.f32 %v578, %v450
        %v607 = vmul.f32 %v578, %v451
        %v608 = vmul.f32 %v582, %v450
        %v609 = vmul.f32 %v582, %v451
        %v610 = vmul.f32 %v586, %v450
        %v611 = vmul.f32 %v586, %v451
        %v612 = vmul.f32 %v590, %v450
        %v613 = vmul.f32 %v590, %v451
        %v614 = vmul.f32 %v594, %v450
        %v615 = vmul.f32 %v594, %v451
        %v616 = vmul.f32 %v598, %v450
        %v617 = vmul.f32 %v598, %v451
        %v618 = vmul.f32 %v602, %v450
        %v619 = vmul.f32 %v602, %v451
        %v620 = vadd.f32 %v556, %v604
        %v621 = vadd.f32 %v557, %v605
        %v622 = vadd.f32 %v558, %v606
        %v623 = vadd.f32 %v559, %v607
        %v624 = vadd.f32 %v560, %v608
        %v625 = vadd.f32 %v561, %v609
        %v626 = vadd.f32 %v562, %v610
        %v627 = vadd.f32 %v563, %v611
        %v628 = vadd.f32 %v564, %v612
        %v629 = vadd.f32 %v565, %v613
        %v630 = vadd.f32 %v566, %v614
        %v631 = vadd.f32 %v567, %v615
        %v632 = vadd.f32 %v568, %v616
        %v633 = vadd.f32 %v569, %v617
        %v634 = vadd.f32 %v570, %v618
        %v635 = vadd.f32 %v571, %v619
        %636 = vset.pattern.permute.xlu0 2
        %637 = vperm.xlu0 %636, %v516
        %v638 = vpop.permute.xlu0 %637
        %640 = vset.pattern.permute.xlu0 2
        %641 = vperm.xlu0 %640, %v517
        %v642 = vpop.permute.xlu0 %641
        %644 = vset.pattern.permute.xlu0 2
        %645 = vperm.xlu0 %644, %v518
        %v646 = vpop.permute.xlu0 %645
        %648 = vset.pattern.permute.xlu0 2
        %649 = vperm.xlu0 %648, %v519
        %v650 = vpop.permute.xlu0 %649
        %652 = vset.pattern.permute.xlu0 2
        %653 = vperm.xlu0 %652, %v520
        %v654 = vpop.permute.xlu0 %653
        %656 = vset.pattern.permute.xlu0 2
        %657 = vperm.xlu0 %656, %v521
        %v658 = vpop.permute.xlu0 %657
        %660 = vset.pattern.permute.xlu0 2
        %661 = vperm.xlu0 %660, %v522
        %v662 = vpop.permute.xlu0 %661
        %664 = vset.pattern.permute.xlu0 2
        %665 = vperm.xlu0 %664, %v523
        %v666 = vpop.permute.xlu0 %665
        %v668 = vmul.f32 %v638, %v452
        %v669 = vmul.f32 %v638, %v453
        %v670 = vmul.f32 %v642, %v452
        %v671 = vmul.f32 %v642, %v453
        %v672 = vmul.f32 %v646, %v452
        %v673 = vmul.f32 %v646, %v453
        %v674 = vmul.f32 %v650, %v452
        %v675 = vmul.f32 %v650, %v453
        %v676 = vmul.f32 %v654, %v452
        %v677 = vmul.f32 %v654, %v453
        %v678 = vmul.f32 %v658, %v452
        %v679 = vmul.f32 %v658, %v453
        %v680 = vmul.f32 %v662, %v452
        %v681 = vmul.f32 %v662, %v453
        %v682 = vmul.f32 %v666, %v452
        %v683 = vmul.f32 %v666, %v453
        %v684 = vadd.f32 %v620, %v668
        %v685 = vadd.f32 %v621, %v669
        %v686 = vadd.f32 %v622, %v670
        %v687 = vadd.f32 %v623, %v671
        %v688 = vadd.f32 %v624, %v672
        %v689 = vadd.f32 %v625, %v673
        %v690 = vadd.f32 %v626, %v674
        %v691 = vadd.f32 %v627, %v675
        %v692 = vadd.f32 %v628, %v676
        %v693 = vadd.f32 %v629, %v677
        %v694 = vadd.f32 %v630, %v678
        %v695 = vadd.f32 %v631, %v679
        %v696 = vadd.f32 %v632, %v680
        %v697 = vadd.f32 %v633, %v681
        %v698 = vadd.f32 %v634, %v682
        %v699 = vadd.f32 %v635, %v683
        %700 = vset.pattern.permute.xlu0 3
        %701 = vperm.xlu0 %700, %v516
        %v702 = vpop.permute.xlu0 %701
        %704 = vset.pattern.permute.xlu0 3
        %705 = vperm.xlu0 %704, %v517
        %v706 = vpop.permute.xlu0 %705
        %708 = vset.pattern.permute.xlu0 3
        %709 = vperm.xlu0 %708, %v518
        %v710 = vpop.permute.xlu0 %709
        %712 = vset.pattern.permute.xlu0 3
        %713 = vperm.xlu0 %712, %v519
        %v714 = vpop.permute.xlu0 %713
        %716 = vset.pattern.permute.xlu0 3
        %717 = vperm.xlu0 %716, %v520
        %v718 = vpop.permute.xlu0 %717
        %720 = vset.pattern.permute.xlu0 3
        %721 = vperm.xlu0 %720, %v521
        %v722 = vpop.permute.xlu0 %721
        %724 = vset.pattern.permute.xlu0 3
        %725 = vperm.xlu0 %724, %v522
        %v726 = vpop.permute.xlu0 %725
        %728 = vset.pattern.permute.xlu0 3
        %729 = vperm.xlu0 %728, %v523
        %v730 = vpop.permute.xlu0 %729
        %v732 = vmul.f32 %v702, %v454
        %v733 = vmul.f32 %v702, %v455
        %v734 = vmul.f32 %v706, %v454
        %v735 = vmul.f32 %v706, %v455
        %v736 = vmul.f32 %v710, %v454
        %v737 = vmul.f32 %v710, %v455
        %v738 = vmul.f32 %v714, %v454
        %v739 = vmul.f32 %v714, %v455
        %v740 = vmul.f32 %v718, %v454
        %v741 = vmul.f32 %v718, %v455
        %v742 = vmul.f32 %v722, %v454
        %v743 = vmul.f32 %v722, %v455
        %v744 = vmul.f32 %v726, %v454
        %v745 = vmul.f32 %v726, %v455
        %v746 = vmul.f32 %v730, %v454
        %v747 = vmul.f32 %v730, %v455
        %v748 = vadd.f32 %v684, %v732
        %v749 = vadd.f32 %v685, %v733
        %v750 = vadd.f32 %v686, %v734
        %v751 = vadd.f32 %v687, %v735
        %v752 = vadd.f32 %v688, %v736
        %v753 = vadd.f32 %v689, %v737
        %v754 = vadd.f32 %v690, %v738
        %v755 = vadd.f32 %v691, %v739
        %v756 = vadd.f32 %v692, %v740
        %v757 = vadd.f32 %v693, %v741
        %v758 = vadd.f32 %v694, %v742
        %v759 = vadd.f32 %v695, %v743
        %v760 = vadd.f32 %v696, %v744
        %v761 = vadd.f32 %v697, %v745
        %v762 = vadd.f32 %v698, %v746
        %v763 = vadd.f32 %v699, %v747
        %v764 = vsel %vm446, 1, 0
        %v765 = vsel %vm447, 1, 0
        %vm766 = vcmp.eq.s32.totalorder %v764, 1
        %vm767 = vcmp.eq.s32.totalorder %v765, 1
        %v768 = vsel %vm766, %v748, -1e+10
        %v769 = vsel %vm767, %v749, -1e+10
        %v770 = vsel %vm766, %v750, -1e+10
        %v771 = vsel %vm767, %v751, -1e+10
        %v772 = vsel %vm766, %v752, -1e+10
        %v773 = vsel %vm767, %v753, -1e+10
        %v774 = vsel %vm766, %v754, -1e+10
        %v775 = vsel %vm767, %v755, -1e+10
        %v776 = vsel %vm766, %v756, -1e+10
        %v777 = vsel %vm767, %v757, -1e+10
        %v778 = vsel %vm766, %v758, -1e+10
        %v779 = vsel %vm767, %v759, -1e+10
        %v780 = vsel %vm766, %v760, -1e+10
        %v781 = vsel %vm767, %v761, -1e+10
        %v782 = vsel %vm766, %v762, -1e+10
        %v783 = vsel %vm767, %v763, -1e+10
        %vm784 = vcmask 130048
        %v785 = vsel %vm784, %v768, -inf
        %786 = vmax.xlane.f32.xlu0 %v785
        %v787 = vpop.xlane.xlu0 %786
        %v788 = vsel %vm784, %v769, -inf
        %789 = vmax.xlane.f32.xlu0 %v788
        %v790 = vpop.xlane.xlu0 %789
        %v791 = vsel %vm784, %v770, -inf
        %792 = vmax.xlane.f32.xlu0 %v791
        %v793 = vpop.xlane.xlu0 %792
        %v794 = vsel %vm784, %v771, -inf
        %795 = vmax.xlane.f32.xlu0 %v794
        %v796 = vpop.xlane.xlu0 %795
        %v797 = vsel %vm784, %v772, -inf
        %798 = vmax.xlane.f32.xlu0 %v797
        %v799 = vpop.xlane.xlu0 %798
        %v800 = vsel %vm784, %v773, -inf
        %801 = vmax.xlane.f32.xlu0 %v800
        %v802 = vpop.xlane.xlu0 %801
        %v803 = vsel %vm784, %v774, -inf
        %804 = vmax.xlane.f32.xlu0 %v803
        %v805 = vpop.xlane.xlu0 %804
        %v806 = vsel %vm784, %v775, -inf
        %807 = vmax.xlane.f32.xlu0 %v806
        %v808 = vpop.xlane.xlu0 %807
        %v809 = vsel %vm784, %v776, -inf
        %810 = vmax.xlane.f32.xlu0 %v809
        %v811 = vpop.xlane.xlu0 %810
        %v812 = vsel %vm784, %v777, -inf
        %813 = vmax.xlane.f32.xlu0 %v812
        %v814 = vpop.xlane.xlu0 %813
        %v815 = vsel %vm784, %v778, -inf
        %816 = vmax.xlane.f32.xlu0 %v815
        %v817 = vpop.xlane.xlu0 %816
        %v818 = vsel %vm784, %v779, -inf
        %819 = vmax.xlane.f32.xlu0 %v818
        %v820 = vpop.xlane.xlu0 %819
        %v821 = vsel %vm784, %v780, -inf
        %822 = vmax.xlane.f32.xlu0 %v821
        %v823 = vpop.xlane.xlu0 %822
        %v824 = vsel %vm784, %v781, -inf
        %825 = vmax.xlane.f32.xlu0 %v824
        %v826 = vpop.xlane.xlu0 %825
        %v827 = vsel %vm784, %v782, -inf
        %828 = vmax.xlane.f32.xlu0 %v827
        %v829 = vpop.xlane.xlu0 %828
        %v830 = vsel %vm784, %v783, -inf
        %831 = vmax.xlane.f32.xlu0 %v830
        %v832 = vpop.xlane.xlu0 %831
        %v833 = vsub.f32 %v768, %v787
        %v834 = vsub.f32 %v769, %v790
        %v835 = vsub.f32 %v770, %v793
        %v836 = vsub.f32 %v771, %v796
        %v837 = vsub.f32 %v772, %v799
        %v838 = vsub.f32 %v773, %v802
        %v839 = vsub.f32 %v774, %v805
        %v840 = vsub.f32 %v775, %v808
        %v841 = vsub.f32 %v776, %v811
        %v842 = vsub.f32 %v777, %v814
        %v843 = vsub.f32 %v778, %v817
        %v844 = vsub.f32 %v779, %v820
        %v845 = vsub.f32 %v780, %v823
        %v846 = vsub.f32 %v781, %v826
        %v847 = vsub.f32 %v782, %v829
        %v848 = vsub.f32 %v783, %v832
        %v849 = vmul.f32 %v833, 1.442695
        %v850 = vpow.pop %v849
        %v851 = vmul.f32 %v834, 1.442695
        %v852 = vpow.pop %v851
        %v853 = vmul.f32 %v835, 1.442695
        %v854 = vpow.pop %v853
        %v855 = vmul.f32 %v836, 1.442695
        %v856 = vpow.pop %v855
        %v857 = vmul.f32 %v837, 1.442695
        %v858 = vpow.pop %v857
        %v859 = vmul.f32 %v838, 1.442695
        %v860 = vpow.pop %v859
        %v861 = vmul.f32 %v839, 1.442695
        %v862 = vpow.pop %v861
        %v863 = vmul.f32 %v840, 1.442695
        %v864 = vpow.pop %v863
        %v865 = vmul.f32 %v841, 1.442695
        %v866 = vpow.pop %v865
        %v867 = vmul.f32 %v842, 1.442695
        %v868 = vpow.pop %v867
        %v869 = vmul.f32 %v843, 1.442695
        %v870 = vpow.pop %v869
        %v871 = vmul.f32 %v844, 1.442695
        %v872 = vpow.pop %v871
        %v873 = vmul.f32 %v845, 1.442695
        %v874 = vpow.pop %v873
        %v875 = vmul.f32 %v846, 1.442695
        %v876 = vpow.pop %v875
        %v877 = vmul.f32 %v847, 1.442695
        %v878 = vpow.pop %v877
        %v879 = vmul.f32 %v848, 1.442695
        %v880 = vpow.pop %v879
        %v881 = vsel %vm784, %v850, 0.0
        %882 = vadd.xlane.f32.xlu0 %v881
        %v883 = vpop.xlane.xlu0 %882
        %v884 = vsel %vm784, %v852, 0.0
        %885 = vadd.xlane.f32.xlu0 %v884
        %v886 = vpop.xlane.xlu0 %885
        %v887 = vsel %vm784, %v854, 0.0
        %888 = vadd.xlane.f32.xlu0 %v887
        %v889 = vpop.xlane.xlu0 %888
        %v890 = vsel %vm784, %v856, 0.0
        %891 = vadd.xlane.f32.xlu0 %v890
        %v892 = vpop.xlane.xlu0 %891
        %v893 = vsel %vm784, %v858, 0.0
        %894 = vadd.xlane.f32.xlu0 %v893
        %v895 = vpop.xlane.xlu0 %894
        %v896 = vsel %vm784, %v860, 0.0
        %897 = vadd.xlane.f32.xlu0 %v896
        %v898 = vpop.xlane.xlu0 %897
        %v899 = vsel %vm784, %v862, 0.0
        %900 = vadd.xlane.f32.xlu0 %v899
        %v901 = vpop.xlane.xlu0 %900
        %v902 = vsel %vm784, %v864, 0.0
        %903 = vadd.xlane.f32.xlu0 %v902
        %v904 = vpop.xlane.xlu0 %903
        %v905 = vsel %vm784, %v866, 0.0
        %906 = vadd.xlane.f32.xlu0 %v905
        %v907 = vpop.xlane.xlu0 %906
        %v908 = vsel %vm784, %v868, 0.0
        %909 = vadd.xlane.f32.xlu0 %v908
        %v910 = vpop.xlane.xlu0 %909
        %v911 = vsel %vm784, %v870, 0.0
        %912 = vadd.xlane.f32.xlu0 %v911
        %v913 = vpop.xlane.xlu0 %912
        %v914 = vsel %vm784, %v872, 0.0
        %915 = vadd.xlane.f32.xlu0 %v914
        %v916 = vpop.xlane.xlu0 %915
        %v917 = vsel %vm784, %v874, 0.0
        %918 = vadd.xlane.f32.xlu0 %v917
        %v919 = vpop.xlane.xlu0 %918
        %v920 = vsel %vm784, %v876, 0.0
        %921 = vadd.xlane.f32.xlu0 %v920
        %v922 = vpop.xlane.xlu0 %921
        %v923 = vsel %vm784, %v878, 0.0
        %924 = vadd.xlane.f32.xlu0 %v923
        %v925 = vpop.xlane.xlu0 %924
        %v926 = vsel %vm784, %v880, 0.0
        %927 = vadd.xlane.f32.xlu0 %v926
        %v928 = vpop.xlane.xlu0 %927
        %v929 = vrcp.pop %v883
        %v930 = vrcp.pop %v886
        %v931 = vrcp.pop %v889
        %v932 = vrcp.pop %v892
        %v933 = vrcp.pop %v895
        %v934 = vrcp.pop %v898
        %v935 = vrcp.pop %v901
        %v936 = vrcp.pop %v904
        %v937 = vrcp.pop %v907
        %v938 = vrcp.pop %v910
        %v939 = vrcp.pop %v913
        %v940 = vrcp.pop %v916
        %v941 = vrcp.pop %v919
        %v942 = vrcp.pop %v922
        %v943 = vrcp.pop %v925
        %v944 = vrcp.pop %v928
        %v945 = vmul.f32 %v850, %v929
        %v946 = vmul.f32 %v852, %v930
        %v947 = vmul.f32 %v854, %v931
        %v948 = vmul.f32 %v856, %v932
        %v949 = vmul.f32 %v858, %v933
        %v950 = vmul.f32 %v860, %v934
        %v951 = vmul.f32 %v862, %v935
        %v952 = vmul.f32 %v864, %v936
        %v953 = vmul.f32 %v866, %v937
        %v954 = vmul.f32 %v868, %v938
        %v955 = vmul.f32 %v870, %v939
        %v956 = vmul.f32 %v872, %v940
        %v957 = vmul.f32 %v874, %v941
        %v958 = vmul.f32 %v876, %v942
        %v959 = vmul.f32 %v878, %v943
        %v960 = vmul.f32 %v880, %v944
        %v961 = vsel %vm766, %v945, 0.0
        %v962 = vsel %vm767, %v946, 0.0
        %v963 = vsel %vm766, %v947, 0.0
        %v964 = vsel %vm767, %v948, 0.0
        %v965 = vsel %vm766, %v949, 0.0
        %v966 = vsel %vm767, %v950, 0.0
        %v967 = vsel %vm766, %v951, 0.0
        %v968 = vsel %vm767, %v952, 0.0
        %v969 = vsel %vm766, %v953, 0.0
        %v970 = vsel %vm767, %v954, 0.0
        %v971 = vsel %vm766, %v955, 0.0
        %v972 = vsel %vm767, %v956, 0.0
        %v973 = vsel %vm766, %v957, 0.0
        %v974 = vsel %vm767, %v958, 0.0
        %v975 = vsel %vm766, %v959, 0.0
        %v976 = vsel %vm767, %v960, 0.0
        %v978 = vrot.slane %v495, 1
        %v979 = vrot.slane %v495, 2
        %v980 = vrot.slane %v495, 3
        %v981 = vrot.slane %v495, 4
        %v982 = vrot.slane %v495, 5
        %v983 = vrot.slane %v495, 6
        %v984 = vrot.slane %v495, 7
        %v986 = vrot.slane %v498, 1
        %v987 = vrot.slane %v498, 2
        %v988 = vrot.slane %v498, 3
        %v989 = vrot.slane %v498, 4
        %v990 = vrot.slane %v498, 5
        %v991 = vrot.slane %v498, 6
        %v992 = vrot.slane %v498, 7
        %v993 = vsel %vm461, 1, 0
        %v994 = vsel %vm462, 1, 0
        %vm995 = vcmp.eq.s32.totalorder %v993, 1
        %vm996 = vcmp.eq.s32.totalorder %v994, 1
        %v997 = vperm.slane %v495, 0
        %v998 = vperm.slane %v978, 0
        %v999 = vperm.slane %v979, 0
        %v1000 = vperm.slane %v980, 0
        %v1001 = vperm.slane %v981, 0
        %v1002 = vperm.slane %v982, 0
        %v1003 = vperm.slane %v983, 0
        %v1004 = vperm.slane %v984, 0
        %v1013 = vperm.slane %v498, 0
        %v1014 = vperm.slane %v986, 0
        %v1015 = vperm.slane %v987, 0
        %v1016 = vperm.slane %v988, 0
        %v1017 = vperm.slane %v989, 0
        %v1018 = vperm.slane %v990, 0
        %v1019 = vperm.slane %v991, 0
        %v1020 = vperm.slane %v992, 0
        %v1029 = vsel %vm995, %v997, %v1013
        %v1030 = vsel %vm996, %v997, %v1013
        %v1031 = vsel %vm995, %v998, %v1014
        %v1032 = vsel %vm996, %v998, %v1014
        %v1033 = vsel %vm995, %v999, %v1015
        %v1034 = vsel %vm996, %v999, %v1015
        %v1035 = vsel %vm995, %v1000, %v1016
        %v1036 = vsel %vm996, %v1000, %v1016
        %v1037 = vsel %vm995, %v1001, %v1017
        %v1038 = vsel %vm996, %v1001, %v1017
        %v1039 = vsel %vm995, %v1002, %v1018
        %v1040 = vsel %vm996, %v1002, %v1018
        %v1041 = vsel %vm995, %v1003, %v1019
        %v1042 = vsel %vm996, %v1003, %v1019
        %v1043 = vsel %vm995, %v1004, %v1020
        %v1044 = vsel %vm996, %v1004, %v1020
        %v1045 = vmul.f32 %v961, %v1029
        %v1046 = vmul.f32 %v962, %v1030
        %v1047 = vmul.f32 %v963, %v1031
        %v1048 = vmul.f32 %v964, %v1032
        %v1049 = vmul.f32 %v965, %v1033
        %v1050 = vmul.f32 %v966, %v1034
        %v1051 = vmul.f32 %v967, %v1035
        %v1052 = vmul.f32 %v968, %v1036
        %v1053 = vmul.f32 %v969, %v1037
        %v1054 = vmul.f32 %v970, %v1038
        %v1055 = vmul.f32 %v971, %v1039
        %v1056 = vmul.f32 %v972, %v1040
        %v1057 = vmul.f32 %v973, %v1041
        %v1058 = vmul.f32 %v974, %v1042
        %v1059 = vmul.f32 %v975, %v1043
        %v1060 = vmul.f32 %v976, %v1044
        %v1061 = vsel %vm784, %v1045, 0.0
        %1062 = vadd.xlane.f32.xlu0 %v1061
        %v1063 = vpop.xlane.xlu0 %1062
        %v1064 = vsel %vm784, %v1046, 0.0
        %1065 = vadd.xlane.f32.xlu0 %v1064
        %v1066 = vpop.xlane.xlu0 %1065
        %v1067 = vsel %vm784, %v1047, 0.0
        %1068 = vadd.xlane.f32.xlu0 %v1067
        %v1069 = vpop.xlane.xlu0 %1068
        %v1070 = vsel %vm784, %v1048, 0.0
        %1071 = vadd.xlane.f32.xlu0 %v1070
        %v1072 = vpop.xlane.xlu0 %1071
        %v1073 = vsel %vm784, %v1049, 0.0
        %1074 = vadd.xlane.f32.xlu0 %v1073
        %v1075 = vpop.xlane.xlu0 %1074
        %v1076 = vsel %vm784, %v1050, 0.0
        %1077 = vadd.xlane.f32.xlu0 %v1076
        %v1078 = vpop.xlane.xlu0 %1077
        %v1079 = vsel %vm784, %v1051, 0.0
        %1080 = vadd.xlane.f32.xlu0 %v1079
        %v1081 = vpop.xlane.xlu0 %1080
        %v1082 = vsel %vm784, %v1052, 0.0
        %1083 = vadd.xlane.f32.xlu0 %v1082
        %v1084 = vpop.xlane.xlu0 %1083
        %v1085 = vsel %vm784, %v1053, 0.0
        %1086 = vadd.xlane.f32.xlu0 %v1085
        %v1087 = vpop.xlane.xlu0 %1086
        %v1088 = vsel %vm784, %v1054, 0.0
        %1089 = vadd.xlane.f32.xlu0 %v1088
        %v1090 = vpop.xlane.xlu0 %1089
        %v1091 = vsel %vm784, %v1055, 0.0
        %1092 = vadd.xlane.f32.xlu0 %v1091
        %v1093 = vpop.xlane.xlu0 %1092
        %v1094 = vsel %vm784, %v1056, 0.0
        %1095 = vadd.xlane.f32.xlu0 %v1094
        %v1096 = vpop.xlane.xlu0 %1095
        %v1097 = vsel %vm784, %v1057, 0.0
        %1098 = vadd.xlane.f32.xlu0 %v1097
        %v1099 = vpop.xlane.xlu0 %1098
        %v1100 = vsel %vm784, %v1058, 0.0
        %1101 = vadd.xlane.f32.xlu0 %v1100
        %v1102 = vpop.xlane.xlu0 %1101
        %v1103 = vsel %vm784, %v1059, 0.0
        %1104 = vadd.xlane.f32.xlu0 %v1103
        %v1105 = vpop.xlane.xlu0 %1104
        %v1106 = vsel %vm784, %v1060, 0.0
        %1107 = vadd.xlane.f32.xlu0 %v1106
        %v1108 = vpop.xlane.xlu0 %1107
        %v1109 = vld [vmem:[%s5] sm:$0xff]
        %1111 = vset.pattern.permute.xlu0 0
        %1112 = vperm.xlu0 %1111, %v1109
        %v1113 = vpop.permute.xlu0 %1112
        %v1114 = vperm.slane %v1113, 0
        %v1115 = vperm.slane %v1113, 1
        %v1116 = vperm.slane %v1113, 2
        %v1117 = vperm.slane %v1113, 3
        %v1118 = vperm.slane %v1113, 4
        %v1119 = vperm.slane %v1113, 5
        %v1120 = vperm.slane %v1113, 6
        %v1121 = vperm.slane %v1113, 7
        %v1130 = vmul.f32 %v1063, %v1114
        %v1131 = vmul.f32 %v1066, %v1114
        %v1132 = vmul.f32 %v1069, %v1115
        %v1133 = vmul.f32 %v1072, %v1115
        %v1134 = vmul.f32 %v1075, %v1116
        %v1135 = vmul.f32 %v1078, %v1116
        %v1136 = vmul.f32 %v1081, %v1117
        %v1137 = vmul.f32 %v1084, %v1117
        %v1138 = vmul.f32 %v1087, %v1118
        %v1139 = vmul.f32 %v1090, %v1118
        %v1140 = vmul.f32 %v1093, %v1119
        %v1141 = vmul.f32 %v1096, %v1119
        %v1142 = vmul.f32 %v1099, %v1120
        %v1143 = vmul.f32 %v1102, %v1120
        %v1144 = vmul.f32 %v1105, %v1121
        %v1145 = vmul.f32 %v1108, %v1121
        %v1146 = vld [vmem:[%s6] sm:$0xff]
        %1148 = vset.pattern.permute.xlu0 0
        %1149 = vperm.xlu0 %1148, %v1146
        %v1150 = vpop.permute.xlu0 %1149
        %v1151 = vperm.slane %v1150, 0
        %v1152 = vperm.slane %v1150, 1
        %v1153 = vperm.slane %v1150, 2
        %v1154 = vperm.slane %v1150, 3
        %v1155 = vperm.slane %v1150, 4
        %v1156 = vperm.slane %v1150, 5
        %v1157 = vperm.slane %v1150, 6
        %v1158 = vperm.slane %v1150, 7
        %v1167 = vadd.f32 %v1130, %v1151
        %v1168 = vadd.f32 %v1131, %v1151
        %v1169 = vadd.f32 %v1132, %v1152
        %v1170 = vadd.f32 %v1133, %v1152
        %v1171 = vadd.f32 %v1134, %v1153
        %v1172 = vadd.f32 %v1135, %v1153
        %v1173 = vadd.f32 %v1136, %v1154
        %v1174 = vadd.f32 %v1137, %v1154
        %v1175 = vadd.f32 %v1138, %v1155
        %v1176 = vadd.f32 %v1139, %v1155
        %v1177 = vadd.f32 %v1140, %v1156
        %v1178 = vadd.f32 %v1141, %v1156
        %v1179 = vadd.f32 %v1142, %v1157
        %v1180 = vadd.f32 %v1143, %v1157
        %v1181 = vadd.f32 %v1144, %v1158
        %v1182 = vadd.f32 %v1145, %v1158
        %vm1183 = vcmp.gt.f32.partialorder %v1167, 0.0
        %vm1184 = vcmp.gt.f32.partialorder %v1168, 0.0
        %vm1185 = vcmp.gt.f32.partialorder %v1169, 0.0
        %vm1186 = vcmp.gt.f32.partialorder %v1170, 0.0
        %vm1187 = vcmp.gt.f32.partialorder %v1171, 0.0
        %vm1188 = vcmp.gt.f32.partialorder %v1172, 0.0
        %vm1189 = vcmp.gt.f32.partialorder %v1173, 0.0
        %vm1190 = vcmp.gt.f32.partialorder %v1174, 0.0
        %vm1191 = vcmp.gt.f32.partialorder %v1175, 0.0
        %vm1192 = vcmp.gt.f32.partialorder %v1176, 0.0
        %vm1193 = vcmp.gt.f32.partialorder %v1177, 0.0
        %vm1194 = vcmp.gt.f32.partialorder %v1178, 0.0
        %vm1195 = vcmp.gt.f32.partialorder %v1179, 0.0
        %vm1196 = vcmp.gt.f32.partialorder %v1180, 0.0
        %vm1197 = vcmp.gt.f32.partialorder %v1181, 0.0
        %vm1198 = vcmp.gt.f32.partialorder %v1182, 0.0
        %v1199 = vmul.f32 %v1167, 1.442695
        %v1200 = vpow.pop %v1199
        %v1201 = vmul.f32 %v1168, 1.442695
        %v1202 = vpow.pop %v1201
        %v1203 = vmul.f32 %v1169, 1.442695
        %v1204 = vpow.pop %v1203
        %v1205 = vmul.f32 %v1170, 1.442695
        %v1206 = vpow.pop %v1205
        %v1207 = vmul.f32 %v1171, 1.442695
        %v1208 = vpow.pop %v1207
        %v1209 = vmul.f32 %v1172, 1.442695
        %v1210 = vpow.pop %v1209
        %v1211 = vmul.f32 %v1173, 1.442695
        %v1212 = vpow.pop %v1211
        %v1213 = vmul.f32 %v1174, 1.442695
        %v1214 = vpow.pop %v1213
        %v1215 = vmul.f32 %v1175, 1.442695
        %v1216 = vpow.pop %v1215
        %v1217 = vmul.f32 %v1176, 1.442695
        %v1218 = vpow.pop %v1217
        %v1219 = vmul.f32 %v1177, 1.442695
        %v1220 = vpow.pop %v1219
        %v1221 = vmul.f32 %v1178, 1.442695
        %v1222 = vpow.pop %v1221
        %v1223 = vmul.f32 %v1179, 1.442695
        %v1224 = vpow.pop %v1223
        %v1225 = vmul.f32 %v1180, 1.442695
        %v1226 = vpow.pop %v1225
        %v1227 = vmul.f32 %v1181, 1.442695
        %v1228 = vpow.pop %v1227
        %v1229 = vmul.f32 %v1182, 1.442695
        %v1230 = vpow.pop %v1229
        %v1231 = vsub.f32 %v1200, 1.0
        %v1232 = vsub.f32 %v1202, 1.0
        %v1233 = vsub.f32 %v1204, 1.0
        %v1234 = vsub.f32 %v1206, 1.0
        %v1235 = vsub.f32 %v1208, 1.0
        %v1236 = vsub.f32 %v1210, 1.0
        %v1237 = vsub.f32 %v1212, 1.0
        %v1238 = vsub.f32 %v1214, 1.0
        %v1239 = vsub.f32 %v1216, 1.0
        %v1240 = vsub.f32 %v1218, 1.0
        %v1241 = vsub.f32 %v1220, 1.0
        %v1242 = vsub.f32 %v1222, 1.0
        %v1243 = vsub.f32 %v1224, 1.0
        %v1244 = vsub.f32 %v1226, 1.0
        %v1245 = vsub.f32 %v1228, 1.0
        %v1246 = vsub.f32 %v1230, 1.0
        %v1247 = vsel %vm1183, %v1167, %v1231
        %v1248 = vsel %vm1184, %v1168, %v1232
        %v1249 = vsel %vm1185, %v1169, %v1233
        %v1250 = vsel %vm1186, %v1170, %v1234
        %v1251 = vsel %vm1187, %v1171, %v1235
        %v1252 = vsel %vm1188, %v1172, %v1236
        %v1253 = vsel %vm1189, %v1173, %v1237
        %v1254 = vsel %vm1190, %v1174, %v1238
        %v1255 = vsel %vm1191, %v1175, %v1239
        %v1256 = vsel %vm1192, %v1176, %v1240
        %v1257 = vsel %vm1193, %v1177, %v1241
        %v1258 = vsel %vm1194, %v1178, %v1242
        %v1259 = vsel %vm1195, %v1179, %v1243
        %v1260 = vsel %vm1196, %v1180, %v1244
        %v1261 = vsel %vm1197, %v1181, %v1245
        %v1262 = vsel %vm1198, %v1182, %v1246
        %v1263 = vld [vmem:[%s8] sm:$0xff]
        %v1264 = vld [vmem:[%s8 + $0x8] sm:$0xff]
        %1281 = vset.pattern.permute.xlu0 0
        %1282 = vperm.xlu0 %1281, %v1247
        %v1283 = vpop.permute.xlu0 %1282
        %1284 = vset.pattern.permute.xlu0 0
        %1285 = vperm.xlu0 %1284, %v1248
        %v1286 = vpop.permute.xlu0 %1285
        %1287 = vset.pattern.permute.xlu0 0
        %1288 = vperm.xlu0 %1287, %v1249
        %v1289 = vpop.permute.xlu0 %1288
        %1290 = vset.pattern.permute.xlu0 0
        %1291 = vperm.xlu0 %1290, %v1250
        %v1292 = vpop.permute.xlu0 %1291
        %1293 = vset.pattern.permute.xlu0 0
        %1294 = vperm.xlu0 %1293, %v1251
        %v1295 = vpop.permute.xlu0 %1294
        %1296 = vset.pattern.permute.xlu0 0
        %1297 = vperm.xlu0 %1296, %v1252
        %v1298 = vpop.permute.xlu0 %1297
        %1299 = vset.pattern.permute.xlu0 0
        %1300 = vperm.xlu0 %1299, %v1253
        %v1301 = vpop.permute.xlu0 %1300
        %1302 = vset.pattern.permute.xlu0 0
        %1303 = vperm.xlu0 %1302, %v1254
        %v1304 = vpop.permute.xlu0 %1303
        %1305 = vset.pattern.permute.xlu0 0
        %1306 = vperm.xlu0 %1305, %v1255
        %v1307 = vpop.permute.xlu0 %1306
        %1308 = vset.pattern.permute.xlu0 0
        %1309 = vperm.xlu0 %1308, %v1256
        %v1310 = vpop.permute.xlu0 %1309
        %1311 = vset.pattern.permute.xlu0 0
        %1312 = vperm.xlu0 %1311, %v1257
        %v1313 = vpop.permute.xlu0 %1312
        %1314 = vset.pattern.permute.xlu0 0
        %1315 = vperm.xlu0 %1314, %v1258
        %v1316 = vpop.permute.xlu0 %1315
        %1317 = vset.pattern.permute.xlu0 0
        %1318 = vperm.xlu0 %1317, %v1259
        %v1319 = vpop.permute.xlu0 %1318
        %1320 = vset.pattern.permute.xlu0 0
        %1321 = vperm.xlu0 %1320, %v1260
        %v1322 = vpop.permute.xlu0 %1321
        %1323 = vset.pattern.permute.xlu0 0
        %1324 = vperm.xlu0 %1323, %v1261
        %v1325 = vpop.permute.xlu0 %1324
        %1326 = vset.pattern.permute.xlu0 0
        %1327 = vperm.xlu0 %1326, %v1262
        %v1328 = vpop.permute.xlu0 %1327
        %v1329 = vperm.slane %v1283, %v460
        %v1330 = vadd.s32 %v460, 4294967288
        %v1331 = vperm.slane %v1286, %v1330
        %vm1332 = vcmask 130112
        %v1333 = vsel %vm1332, %v1331, %v1329
        %v1334 = vperm.slane %v1289, %v460
        %v1335 = vperm.slane %v1292, %v1330
        %v1336 = vsel %vm1332, %v1335, %v1334
        %v1337 = vperm.slane %v1295, %v460
        %v1338 = vperm.slane %v1298, %v1330
        %v1339 = vsel %vm1332, %v1338, %v1337
        %v1340 = vperm.slane %v1301, %v460
        %v1341 = vperm.slane %v1304, %v1330
        %v1342 = vsel %vm1332, %v1341, %v1340
        %v1343 = vperm.slane %v1307, %v460
        %v1344 = vperm.slane %v1310, %v1330
        %v1345 = vsel %vm1332, %v1344, %v1343
        %v1346 = vperm.slane %v1313, %v460
        %v1347 = vperm.slane %v1316, %v1330
        %v1348 = vsel %vm1332, %v1347, %v1346
        %v1349 = vperm.slane %v1319, %v460
        %v1350 = vperm.slane %v1322, %v1330
        %v1351 = vsel %vm1332, %v1350, %v1349
        %v1352 = vperm.slane %v1325, %v460
        %v1353 = vperm.slane %v1328, %v1330
        %v1354 = vsel %vm1332, %v1353, %v1352
        %vm1355 = vcmask 1041409
        %v1356 = vsel %vm1355, %v1336, %v1333
        %vm1357 = vcmask 1042434
        %v1358 = vsel %vm1357, %v1339, %v1356
        %vm1359 = vcmask 1043459
        %v1360 = vsel %vm1359, %v1342, %v1358
        %vm1361 = vcmask 1044484
        %v1362 = vsel %vm1361, %v1345, %v1360
        %vm1363 = vcmask 1045509
        %v1364 = vsel %vm1363, %v1348, %v1362
        %vm1365 = vcmask 1046534
        %v1366 = vsel %vm1365, %v1351, %v1364
        %vm1367 = vcmask 1047559
        %v1368 = vsel %vm1367, %v1354, %v1366
        %vm1370 = vcmask 64512
        %v1372 = vsel %vm1370, %v1263, 0
        %v1375 = vsel %vm1370, %v1264, 0
        %1377 = vmatpush.msra.mxu0 0.0
        %1378 = vmatpush.msra.mxu0 0.0
        %1379 = vmatpush.msra.mxu0 0.0
        %1380 = vmatpush.msra.mxu0 0.0
        %1381 = vmatpush.msra.mxu0 0.0
        %1382 = vmatpush.msra.mxu0 0.0
        %1383 = vmatpush.msra.mxu0 0.0
        %1384 = vmatpush.msra.mxu0 0.0
        %1385 = vmatpush.msra.mxu0 0.0
        %1386 = vmatpush.msra.mxu0 0.0
        %1387 = vmatpush.msra.mxu0 0.0
        %1388 = vmatpush.msra.mxu0 0.0
        %1389 = vmatpush.msra.mxu0 0.0
        %1390 = vmatpush.msra.mxu0 0.0
        %1391 = vmatpush.msra.mxu0 0.0
        %1392 = vmatpush.msra.mxu0 %v1368
        %1393 = vmatmul.f32.gmra.mxu0 %v1372
        %v1394 = vpop.f32.mrf.mxu0
        %v1395 = vadd.f32 0.0, %v1394
        %1396 = vmatmul.f32.gmra.mxu0 %v1375
        %v1397 = vpop.f32.mrf.mxu0
        %v1398 = vadd.f32 0.0, %v1397
        %1399 = vdwg.mxu0
        %v1400 = vld [vmem:[%s7] sm:$0x1]
        %v1401 = vld [vmem:[%s7 + $0x1] sm:$0x1]
        %v1402 = vld [vmem:[%s7 + $0x2] sm:$0x1]
        %v1403 = vld [vmem:[%s7 + $0x3] sm:$0x1]
        %v1404 = vld [vmem:[%s7 + $0x4] sm:$0x1]
        %v1405 = vld [vmem:[%s7 + $0x5] sm:$0x1]
        %v1406 = vld [vmem:[%s7 + $0x6] sm:$0x1]
        %v1407 = vld [vmem:[%s7 + $0x7] sm:$0x1]
        %v1416 = vperm.slane %v1400, 0
        %v1417 = vperm.slane %v1401, 0
        %v1418 = vperm.slane %v1402, 0
        %v1419 = vperm.slane %v1403, 0
        %v1420 = vperm.slane %v1404, 0
        %v1421 = vperm.slane %v1405, 0
        %v1422 = vperm.slane %v1406, 0
        %v1423 = vperm.slane %v1407, 0
        %1424 = vset.pattern.permute.xlu0 0
        %1425 = vperm.xlu0 %1424, %v1416
        %v1426 = vpop.permute.xlu0 %1425
        %1428 = vset.pattern.permute.xlu0 0
        %1429 = vperm.xlu0 %1428, %v1417
        %v1430 = vpop.permute.xlu0 %1429
        %1432 = vset.pattern.permute.xlu0 0
        %1433 = vperm.xlu0 %1432, %v1418
        %v1434 = vpop.permute.xlu0 %1433
        %1436 = vset.pattern.permute.xlu0 0
        %1437 = vperm.xlu0 %1436, %v1419
        %v1438 = vpop.permute.xlu0 %1437
        %1440 = vset.pattern.permute.xlu0 0
        %1441 = vperm.xlu0 %1440, %v1420
        %v1442 = vpop.permute.xlu0 %1441
        %1444 = vset.pattern.permute.xlu0 0
        %1445 = vperm.xlu0 %1444, %v1421
        %v1446 = vpop.permute.xlu0 %1445
        %1448 = vset.pattern.permute.xlu0 0
        %1449 = vperm.xlu0 %1448, %v1422
        %v1450 = vpop.permute.xlu0 %1449
        %1452 = vset.pattern.permute.xlu0 0
        %1453 = vperm.xlu0 %1452, %v1423
        %v1454 = vpop.permute.xlu0 %1453
        %v1456 = vmul.f32 %v1426, %v448
        %v1457 = vmul.f32 %v1426, %v449
        %v1458 = vmul.f32 %v1430, %v448
        %v1459 = vmul.f32 %v1430, %v449
        %v1460 = vmul.f32 %v1434, %v448
        %v1461 = vmul.f32 %v1434, %v449
        %v1462 = vmul.f32 %v1438, %v448
        %v1463 = vmul.f32 %v1438, %v449
        %v1464 = vmul.f32 %v1442, %v448
        %v1465 = vmul.f32 %v1442, %v449
        %v1466 = vmul.f32 %v1446, %v448
        %v1467 = vmul.f32 %v1446, %v449
        %v1468 = vmul.f32 %v1450, %v448
        %v1469 = vmul.f32 %v1450, %v449
        %v1470 = vmul.f32 %v1454, %v448
        %v1471 = vmul.f32 %v1454, %v449
        %1472 = vset.pattern.permute.xlu0 1
        %1473 = vperm.xlu0 %1472, %v1416
        %v1474 = vpop.permute.xlu0 %1473
        %1476 = vset.pattern.permute.xlu0 1
        %1477 = vperm.xlu0 %1476, %v1417
        %v1478 = vpop.permute.xlu0 %1477
        %1480 = vset.pattern.permute.xlu0 1
        %1481 = vperm.xlu0 %1480, %v1418
        %v1482 = vpop.permute.xlu0 %1481
        %1484 = vset.pattern.permute.xlu0 1
        %1485 = vperm.xlu0 %1484, %v1419
        %v1486 = vpop.permute.xlu0 %1485
        %1488 = vset.pattern.permute.xlu0 1
        %1489 = vperm.xlu0 %1488, %v1420
        %v1490 = vpop.permute.xlu0 %1489
        %1492 = vset.pattern.permute.xlu0 1
        %1493 = vperm.xlu0 %1492, %v1421
        %v1494 = vpop.permute.xlu0 %1493
        %1496 = vset.pattern.permute.xlu0 1
        %1497 = vperm.xlu0 %1496, %v1422
        %v1498 = vpop.permute.xlu0 %1497
        %1500 = vset.pattern.permute.xlu0 1
        %1501 = vperm.xlu0 %1500, %v1423
        %v1502 = vpop.permute.xlu0 %1501
        %v1504 = vmul.f32 %v1474, %v450
        %v1505 = vmul.f32 %v1474, %v451
        %v1506 = vmul.f32 %v1478, %v450
        %v1507 = vmul.f32 %v1478, %v451
        %v1508 = vmul.f32 %v1482, %v450
        %v1509 = vmul.f32 %v1482, %v451
        %v1510 = vmul.f32 %v1486, %v450
        %v1511 = vmul.f32 %v1486, %v451
        %v1512 = vmul.f32 %v1490, %v450
        %v1513 = vmul.f32 %v1490, %v451
        %v1514 = vmul.f32 %v1494, %v450
        %v1515 = vmul.f32 %v1494, %v451
        %v1516 = vmul.f32 %v1498, %v450
        %v1517 = vmul.f32 %v1498, %v451
        %v1518 = vmul.f32 %v1502, %v450
        %v1519 = vmul.f32 %v1502, %v451
        %v1520 = vadd.f32 %v1456, %v1504
        %v1521 = vadd.f32 %v1457, %v1505
        %v1522 = vadd.f32 %v1458, %v1506
        %v1523 = vadd.f32 %v1459, %v1507
        %v1524 = vadd.f32 %v1460, %v1508
        %v1525 = vadd.f32 %v1461, %v1509
        %v1526 = vadd.f32 %v1462, %v1510
        %v1527 = vadd.f32 %v1463, %v1511
        %v1528 = vadd.f32 %v1464, %v1512
        %v1529 = vadd.f32 %v1465, %v1513
        %v1530 = vadd.f32 %v1466, %v1514
        %v1531 = vadd.f32 %v1467, %v1515
        %v1532 = vadd.f32 %v1468, %v1516
        %v1533 = vadd.f32 %v1469, %v1517
        %v1534 = vadd.f32 %v1470, %v1518
        %v1535 = vadd.f32 %v1471, %v1519
        %1536 = vset.pattern.permute.xlu0 2
        %1537 = vperm.xlu0 %1536, %v1416
        %v1538 = vpop.permute.xlu0 %1537
        %1540 = vset.pattern.permute.xlu0 2
        %1541 = vperm.xlu0 %1540, %v1417
        %v1542 = vpop.permute.xlu0 %1541
        %1544 = vset.pattern.permute.xlu0 2
        %1545 = vperm.xlu0 %1544, %v1418
        %v1546 = vpop.permute.xlu0 %1545
        %1548 = vset.pattern.permute.xlu0 2
        %1549 = vperm.xlu0 %1548, %v1419
        %v1550 = vpop.permute.xlu0 %1549
        %1552 = vset.pattern.permute.xlu0 2
        %1553 = vperm.xlu0 %1552, %v1420
        %v1554 = vpop.permute.xlu0 %1553
        %1556 = vset.pattern.permute.xlu0 2
        %1557 = vperm.xlu0 %1556, %v1421
        %v1558 = vpop.permute.xlu0 %1557
        %1560 = vset.pattern.permute.xlu0 2
        %1561 = vperm.xlu0 %1560, %v1422
        %v1562 = vpop.permute.xlu0 %1561
        %1564 = vset.pattern.permute.xlu0 2
        %1565 = vperm.xlu0 %1564, %v1423
        %v1566 = vpop.permute.xlu0 %1565
        %v1568 = vmul.f32 %v1538, %v452
        %v1569 = vmul.f32 %v1538, %v453
        %v1570 = vmul.f32 %v1542, %v452
        %v1571 = vmul.f32 %v1542, %v453
        %v1572 = vmul.f32 %v1546, %v452
        %v1573 = vmul.f32 %v1546, %v453
        %v1574 = vmul.f32 %v1550, %v452
        %v1575 = vmul.f32 %v1550, %v453
        %v1576 = vmul.f32 %v1554, %v452
        %v1577 = vmul.f32 %v1554, %v453
        %v1578 = vmul.f32 %v1558, %v452
        %v1579 = vmul.f32 %v1558, %v453
        %v1580 = vmul.f32 %v1562, %v452
        %v1581 = vmul.f32 %v1562, %v453
        %v1582 = vmul.f32 %v1566, %v452
        %v1583 = vmul.f32 %v1566, %v453
        %v1584 = vadd.f32 %v1520, %v1568
        %v1585 = vadd.f32 %v1521, %v1569
        %v1586 = vadd.f32 %v1522, %v1570
        %v1587 = vadd.f32 %v1523, %v1571
        %v1588 = vadd.f32 %v1524, %v1572
        %v1589 = vadd.f32 %v1525, %v1573
        %v1590 = vadd.f32 %v1526, %v1574
        %v1591 = vadd.f32 %v1527, %v1575
        %v1592 = vadd.f32 %v1528, %v1576
        %v1593 = vadd.f32 %v1529, %v1577
        %v1594 = vadd.f32 %v1530, %v1578
        %v1595 = vadd.f32 %v1531, %v1579
        %v1596 = vadd.f32 %v1532, %v1580
        %v1597 = vadd.f32 %v1533, %v1581
        %v1598 = vadd.f32 %v1534, %v1582
        %v1599 = vadd.f32 %v1535, %v1583
        %1600 = vset.pattern.permute.xlu0 3
        %1601 = vperm.xlu0 %1600, %v1416
        %v1602 = vpop.permute.xlu0 %1601
        %1604 = vset.pattern.permute.xlu0 3
        %1605 = vperm.xlu0 %1604, %v1417
        %v1606 = vpop.permute.xlu0 %1605
        %1608 = vset.pattern.permute.xlu0 3
        %1609 = vperm.xlu0 %1608, %v1418
        %v1610 = vpop.permute.xlu0 %1609
        %1612 = vset.pattern.permute.xlu0 3
        %1613 = vperm.xlu0 %1612, %v1419
        %v1614 = vpop.permute.xlu0 %1613
        %1616 = vset.pattern.permute.xlu0 3
        %1617 = vperm.xlu0 %1616, %v1420
        %v1618 = vpop.permute.xlu0 %1617
        %1620 = vset.pattern.permute.xlu0 3
        %1621 = vperm.xlu0 %1620, %v1421
        %v1622 = vpop.permute.xlu0 %1621
        %1624 = vset.pattern.permute.xlu0 3
        %1625 = vperm.xlu0 %1624, %v1422
        %v1626 = vpop.permute.xlu0 %1625
        %1628 = vset.pattern.permute.xlu0 3
        %1629 = vperm.xlu0 %1628, %v1423
        %v1630 = vpop.permute.xlu0 %1629
        %v1632 = vmul.f32 %v1602, %v454
        %v1633 = vmul.f32 %v1602, %v455
        %v1634 = vmul.f32 %v1606, %v454
        %v1635 = vmul.f32 %v1606, %v455
        %v1636 = vmul.f32 %v1610, %v454
        %v1637 = vmul.f32 %v1610, %v455
        %v1638 = vmul.f32 %v1614, %v454
        %v1639 = vmul.f32 %v1614, %v455
        %v1640 = vmul.f32 %v1618, %v454
        %v1641 = vmul.f32 %v1618, %v455
        %v1642 = vmul.f32 %v1622, %v454
        %v1643 = vmul.f32 %v1622, %v455
        %v1644 = vmul.f32 %v1626, %v454
        %v1645 = vmul.f32 %v1626, %v455
        %v1646 = vmul.f32 %v1630, %v454
        %v1647 = vmul.f32 %v1630, %v455
        %v1648 = vadd.f32 %v1584, %v1632
        %v1649 = vadd.f32 %v1585, %v1633
        %v1650 = vadd.f32 %v1586, %v1634
        %v1651 = vadd.f32 %v1587, %v1635
        %v1652 = vadd.f32 %v1588, %v1636
        %v1653 = vadd.f32 %v1589, %v1637
        %v1654 = vadd.f32 %v1590, %v1638
        %v1655 = vadd.f32 %v1591, %v1639
        %v1656 = vadd.f32 %v1592, %v1640
        %v1657 = vadd.f32 %v1593, %v1641
        %v1658 = vadd.f32 %v1594, %v1642
        %v1659 = vadd.f32 %v1595, %v1643
        %v1660 = vadd.f32 %v1596, %v1644
        %v1661 = vadd.f32 %v1597, %v1645
        %v1662 = vadd.f32 %v1598, %v1646
        %v1663 = vadd.f32 %v1599, %v1647
        %v1664 = vsel %vm766, %v1648, -1e+10
        %v1665 = vsel %vm767, %v1649, -1e+10
        %v1666 = vsel %vm766, %v1650, -1e+10
        %v1667 = vsel %vm767, %v1651, -1e+10
        %v1668 = vsel %vm766, %v1652, -1e+10
        %v1669 = vsel %vm767, %v1653, -1e+10
        %v1670 = vsel %vm766, %v1654, -1e+10
        %v1671 = vsel %vm767, %v1655, -1e+10
        %v1672 = vsel %vm766, %v1656, -1e+10
        %v1673 = vsel %vm767, %v1657, -1e+10
        %v1674 = vsel %vm766, %v1658, -1e+10
        %v1675 = vsel %vm767, %v1659, -1e+10
        %v1676 = vsel %vm766, %v1660, -1e+10
        %v1677 = vsel %vm767, %v1661, -1e+10
        %v1678 = vsel %vm766, %v1662, -1e+10
        %v1679 = vsel %vm767, %v1663, -1e+10
        %v1680 = vsel %vm784, %v1664, -inf
        %1681 = vmax.xlane.f32.xlu0 %v1680
        %v1682 = vpop.xlane.xlu0 %1681
        %v1683 = vsel %vm784, %v1665, -inf
        %1684 = vmax.xlane.f32.xlu0 %v1683
        %v1685 = vpop.xlane.xlu0 %1684
        %v1686 = vsel %vm784, %v1666, -inf
        %1687 = vmax.xlane.f32.xlu0 %v1686
        %v1688 = vpop.xlane.xlu0 %1687
        %v1689 = vsel %vm784, %v1667, -inf
        %1690 = vmax.xlane.f32.xlu0 %v1689
        %v1691 = vpop.xlane.xlu0 %1690
        %v1692 = vsel %vm784, %v1668, -inf
        %1693 = vmax.xlane.f32.xlu0 %v1692
        %v1694 = vpop.xlane.xlu0 %1693
        %v1695 = vsel %vm784, %v1669, -inf
        %1696 = vmax.xlane.f32.xlu0 %v1695
        %v1697 = vpop.xlane.xlu0 %1696
        %v1698 = vsel %vm784, %v1670, -inf
        %1699 = vmax.xlane.f32.xlu0 %v1698
        %v1700 = vpop.xlane.xlu0 %1699
        %v1701 = vsel %vm784, %v1671, -inf
        %1702 = vmax.xlane.f32.xlu0 %v1701
        %v1703 = vpop.xlane.xlu0 %1702
        %v1704 = vsel %vm784, %v1672, -inf
        %1705 = vmax.xlane.f32.xlu0 %v1704
        %v1706 = vpop.xlane.xlu0 %1705
        %v1707 = vsel %vm784, %v1673, -inf
        %1708 = vmax.xlane.f32.xlu0 %v1707
        %v1709 = vpop.xlane.xlu0 %1708
        %v1710 = vsel %vm784, %v1674, -inf
        %1711 = vmax.xlane.f32.xlu0 %v1710
        %v1712 = vpop.xlane.xlu0 %1711
        %v1713 = vsel %vm784, %v1675, -inf
        %1714 = vmax.xlane.f32.xlu0 %v1713
        %v1715 = vpop.xlane.xlu0 %1714
        %v1716 = vsel %vm784, %v1676, -inf
        %1717 = vmax.xlane.f32.xlu0 %v1716
        %v1718 = vpop.xlane.xlu0 %1717
        %v1719 = vsel %vm784, %v1677, -inf
        %1720 = vmax.xlane.f32.xlu0 %v1719
        %v1721 = vpop.xlane.xlu0 %1720
        %v1722 = vsel %vm784, %v1678, -inf
        %1723 = vmax.xlane.f32.xlu0 %v1722
        %v1724 = vpop.xlane.xlu0 %1723
        %v1725 = vsel %vm784, %v1679, -inf
        %1726 = vmax.xlane.f32.xlu0 %v1725
        %v1727 = vpop.xlane.xlu0 %1726
        %v1728 = vsub.f32 %v1664, %v1682
        %v1729 = vsub.f32 %v1665, %v1685
        %v1730 = vsub.f32 %v1666, %v1688
        %v1731 = vsub.f32 %v1667, %v1691
        %v1732 = vsub.f32 %v1668, %v1694
        %v1733 = vsub.f32 %v1669, %v1697
        %v1734 = vsub.f32 %v1670, %v1700
        %v1735 = vsub.f32 %v1671, %v1703
        %v1736 = vsub.f32 %v1672, %v1706
        %v1737 = vsub.f32 %v1673, %v1709
        %v1738 = vsub.f32 %v1674, %v1712
        %v1739 = vsub.f32 %v1675, %v1715
        %v1740 = vsub.f32 %v1676, %v1718
        %v1741 = vsub.f32 %v1677, %v1721
        %v1742 = vsub.f32 %v1678, %v1724
        %v1743 = vsub.f32 %v1679, %v1727
        %v1744 = vmul.f32 %v1728, 1.442695
        %v1745 = vpow.pop %v1744
        %v1746 = vmul.f32 %v1729, 1.442695
        %v1747 = vpow.pop %v1746
        %v1748 = vmul.f32 %v1730, 1.442695
        %v1749 = vpow.pop %v1748
        %v1750 = vmul.f32 %v1731, 1.442695
        %v1751 = vpow.pop %v1750
        %v1752 = vmul.f32 %v1732, 1.442695
        %v1753 = vpow.pop %v1752
        %v1754 = vmul.f32 %v1733, 1.442695
        %v1755 = vpow.pop %v1754
        %v1756 = vmul.f32 %v1734, 1.442695
        %v1757 = vpow.pop %v1756
        %v1758 = vmul.f32 %v1735, 1.442695
        %v1759 = vpow.pop %v1758
        %v1760 = vmul.f32 %v1736, 1.442695
        %v1761 = vpow.pop %v1760
        %v1762 = vmul.f32 %v1737, 1.442695
        %v1763 = vpow.pop %v1762
        %v1764 = vmul.f32 %v1738, 1.442695
        %v1765 = vpow.pop %v1764
        %v1766 = vmul.f32 %v1739, 1.442695
        %v1767 = vpow.pop %v1766
        %v1768 = vmul.f32 %v1740, 1.442695
        %v1769 = vpow.pop %v1768
        %v1770 = vmul.f32 %v1741, 1.442695
        %v1771 = vpow.pop %v1770
        %v1772 = vmul.f32 %v1742, 1.442695
        %v1773 = vpow.pop %v1772
        %v1774 = vmul.f32 %v1743, 1.442695
        %v1775 = vpow.pop %v1774
        %v1776 = vsel %vm784, %v1745, 0.0
        %1777 = vadd.xlane.f32.xlu0 %v1776
        %v1778 = vpop.xlane.xlu0 %1777
        %v1779 = vsel %vm784, %v1747, 0.0
        %1780 = vadd.xlane.f32.xlu0 %v1779
        %v1781 = vpop.xlane.xlu0 %1780
        %v1782 = vsel %vm784, %v1749, 0.0
        %1783 = vadd.xlane.f32.xlu0 %v1782
        %v1784 = vpop.xlane.xlu0 %1783
        %v1785 = vsel %vm784, %v1751, 0.0
        %1786 = vadd.xlane.f32.xlu0 %v1785
        %v1787 = vpop.xlane.xlu0 %1786
        %v1788 = vsel %vm784, %v1753, 0.0
        %1789 = vadd.xlane.f32.xlu0 %v1788
        %v1790 = vpop.xlane.xlu0 %1789
        %v1791 = vsel %vm784, %v1755, 0.0
        %1792 = vadd.xlane.f32.xlu0 %v1791
        %v1793 = vpop.xlane.xlu0 %1792
        %v1794 = vsel %vm784, %v1757, 0.0
        %1795 = vadd.xlane.f32.xlu0 %v1794
        %v1796 = vpop.xlane.xlu0 %1795
        %v1797 = vsel %vm784, %v1759, 0.0
        %1798 = vadd.xlane.f32.xlu0 %v1797
        %v1799 = vpop.xlane.xlu0 %1798
        %v1800 = vsel %vm784, %v1761, 0.0
        %1801 = vadd.xlane.f32.xlu0 %v1800
        %v1802 = vpop.xlane.xlu0 %1801
        %v1803 = vsel %vm784, %v1763, 0.0
        %1804 = vadd.xlane.f32.xlu0 %v1803
        %v1805 = vpop.xlane.xlu0 %1804
        %v1806 = vsel %vm784, %v1765, 0.0
        %1807 = vadd.xlane.f32.xlu0 %v1806
        %v1808 = vpop.xlane.xlu0 %1807
        %v1809 = vsel %vm784, %v1767, 0.0
        %1810 = vadd.xlane.f32.xlu0 %v1809
        %v1811 = vpop.xlane.xlu0 %1810
        %v1812 = vsel %vm784, %v1769, 0.0
        %1813 = vadd.xlane.f32.xlu0 %v1812
        %v1814 = vpop.xlane.xlu0 %1813
        %v1815 = vsel %vm784, %v1771, 0.0
        %1816 = vadd.xlane.f32.xlu0 %v1815
        %v1817 = vpop.xlane.xlu0 %1816
        %v1818 = vsel %vm784, %v1773, 0.0
        %1819 = vadd.xlane.f32.xlu0 %v1818
        %v1820 = vpop.xlane.xlu0 %1819
        %v1821 = vsel %vm784, %v1775, 0.0
        %1822 = vadd.xlane.f32.xlu0 %v1821
        %v1823 = vpop.xlane.xlu0 %1822
        %v1824 = vrcp.pop %v1778
        %v1825 = vrcp.pop %v1781
        %v1826 = vrcp.pop %v1784
        %v1827 = vrcp.pop %v1787
        %v1828 = vrcp.pop %v1790
        %v1829 = vrcp.pop %v1793
        %v1830 = vrcp.pop %v1796
        %v1831 = vrcp.pop %v1799
        %v1832 = vrcp.pop %v1802
        %v1833 = vrcp.pop %v1805
        %v1834 = vrcp.pop %v1808
        %v1835 = vrcp.pop %v1811
        %v1836 = vrcp.pop %v1814
        %v1837 = vrcp.pop %v1817
        %v1838 = vrcp.pop %v1820
        %v1839 = vrcp.pop %v1823
        %v1840 = vmul.f32 %v1745, %v1824
        %v1841 = vmul.f32 %v1747, %v1825
        %v1842 = vmul.f32 %v1749, %v1826
        %v1843 = vmul.f32 %v1751, %v1827
        %v1844 = vmul.f32 %v1753, %v1828
        %v1845 = vmul.f32 %v1755, %v1829
        %v1846 = vmul.f32 %v1757, %v1830
        %v1847 = vmul.f32 %v1759, %v1831
        %v1848 = vmul.f32 %v1761, %v1832
        %v1849 = vmul.f32 %v1763, %v1833
        %v1850 = vmul.f32 %v1765, %v1834
        %v1851 = vmul.f32 %v1767, %v1835
        %v1852 = vmul.f32 %v1769, %v1836
        %v1853 = vmul.f32 %v1771, %v1837
        %v1854 = vmul.f32 %v1773, %v1838
        %v1855 = vmul.f32 %v1775, %v1839
        %v1856 = vsel %vm766, %v1840, 0.0
        %v1857 = vsel %vm767, %v1841, 0.0
        %v1858 = vsel %vm766, %v1842, 0.0
        %v1859 = vsel %vm767, %v1843, 0.0
        %v1860 = vsel %vm766, %v1844, 0.0
        %v1861 = vsel %vm767, %v1845, 0.0
        %v1862 = vsel %vm766, %v1846, 0.0
        %v1863 = vsel %vm767, %v1847, 0.0
        %v1864 = vsel %vm766, %v1848, 0.0
        %v1865 = vsel %vm767, %v1849, 0.0
        %v1866 = vsel %vm766, %v1850, 0.0
        %v1867 = vsel %vm767, %v1851, 0.0
        %v1868 = vsel %vm766, %v1852, 0.0
        %v1869 = vsel %vm767, %v1853, 0.0
        %v1870 = vsel %vm766, %v1854, 0.0
        %v1871 = vsel %vm767, %v1855, 0.0
        %v1873 = vrot.slane %v1395, 1
        %v1874 = vrot.slane %v1395, 2
        %v1875 = vrot.slane %v1395, 3
        %v1876 = vrot.slane %v1395, 4
        %v1877 = vrot.slane %v1395, 5
        %v1878 = vrot.slane %v1395, 6
        %v1879 = vrot.slane %v1395, 7
        %v1881 = vrot.slane %v1398, 1
        %v1882 = vrot.slane %v1398, 2
        %v1883 = vrot.slane %v1398, 3
        %v1884 = vrot.slane %v1398, 4
        %v1885 = vrot.slane %v1398, 5
        %v1886 = vrot.slane %v1398, 6
        %v1887 = vrot.slane %v1398, 7
        %v1888 = vperm.slane %v1395, 0
        %v1889 = vperm.slane %v1873, 0
        %v1890 = vperm.slane %v1874, 0
        %v1891 = vperm.slane %v1875, 0
        %v1892 = vperm.slane %v1876, 0
        %v1893 = vperm.slane %v1877, 0
        %v1894 = vperm.slane %v1878, 0
        %v1895 = vperm.slane %v1879, 0
        %v1904 = vperm.slane %v1398, 0
        %v1905 = vperm.slane %v1881, 0
        %v1906 = vperm.slane %v1882, 0
        %v1907 = vperm.slane %v1883, 0
        %v1908 = vperm.slane %v1884, 0
        %v1909 = vperm.slane %v1885, 0
        %v1910 = vperm.slane %v1886, 0
        %v1911 = vperm.slane %v1887, 0
        %v1920 = vsel %vm995, %v1888, %v1904
        %v1921 = vsel %vm996, %v1888, %v1904
        %v1922 = vsel %vm995, %v1889, %v1905
        %v1923 = vsel %vm996, %v1889, %v1905
        %v1924 = vsel %vm995, %v1890, %v1906
        %v1925 = vsel %vm996, %v1890, %v1906
        %v1926 = vsel %vm995, %v1891, %v1907
        %v1927 = vsel %vm996, %v1891, %v1907
        %v1928 = vsel %vm995, %v1892, %v1908
        %v1929 = vsel %vm996, %v1892, %v1908
        %v1930 = vsel %vm995, %v1893, %v1909
        %v1931 = vsel %vm996, %v1893, %v1909
        %v1932 = vsel %vm995, %v1894, %v1910
        %v1933 = vsel %vm996, %v1894, %v1910
        %v1934 = vsel %vm995, %v1895, %v1911
        %v1935 = vsel %vm996, %v1895, %v1911
        %v1936 = vmul.f32 %v1856, %v1920
        %v1937 = vmul.f32 %v1857, %v1921
        %v1938 = vmul.f32 %v1858, %v1922
        %v1939 = vmul.f32 %v1859, %v1923
        %v1940 = vmul.f32 %v1860, %v1924
        %v1941 = vmul.f32 %v1861, %v1925
        %v1942 = vmul.f32 %v1862, %v1926
        %v1943 = vmul.f32 %v1863, %v1927
        %v1944 = vmul.f32 %v1864, %v1928
        %v1945 = vmul.f32 %v1865, %v1929
        %v1946 = vmul.f32 %v1866, %v1930
        %v1947 = vmul.f32 %v1867, %v1931
        %v1948 = vmul.f32 %v1868, %v1932
        %v1949 = vmul.f32 %v1869, %v1933
        %v1950 = vmul.f32 %v1870, %v1934
        %v1951 = vmul.f32 %v1871, %v1935
        %v1952 = vsel %vm784, %v1936, 0.0
        %1953 = vadd.xlane.f32.xlu0 %v1952
        %v1954 = vpop.xlane.xlu0 %1953
        %v1955 = vsel %vm784, %v1937, 0.0
        %1956 = vadd.xlane.f32.xlu0 %v1955
        %v1957 = vpop.xlane.xlu0 %1956
        %v1958 = vsel %vm784, %v1938, 0.0
        %1959 = vadd.xlane.f32.xlu0 %v1958
        %v1960 = vpop.xlane.xlu0 %1959
        %v1961 = vsel %vm784, %v1939, 0.0
        %1962 = vadd.xlane.f32.xlu0 %v1961
        %v1963 = vpop.xlane.xlu0 %1962
        %v1964 = vsel %vm784, %v1940, 0.0
        %1965 = vadd.xlane.f32.xlu0 %v1964
        %v1966 = vpop.xlane.xlu0 %1965
        %v1967 = vsel %vm784, %v1941, 0.0
        %1968 = vadd.xlane.f32.xlu0 %v1967
        %v1969 = vpop.xlane.xlu0 %1968
        %v1970 = vsel %vm784, %v1942, 0.0
        %1971 = vadd.xlane.f32.xlu0 %v1970
        %v1972 = vpop.xlane.xlu0 %1971
        %v1973 = vsel %vm784, %v1943, 0.0
        %1974 = vadd.xlane.f32.xlu0 %v1973
        %v1975 = vpop.xlane.xlu0 %1974
        %v1976 = vsel %vm784, %v1944, 0.0
        %1977 = vadd.xlane.f32.xlu0 %v1976
        %v1978 = vpop.xlane.xlu0 %1977
        %v1979 = vsel %vm784, %v1945, 0.0
        %1980 = vadd.xlane.f32.xlu0 %v1979
        %v1981 = vpop.xlane.xlu0 %1980
        %v1982 = vsel %vm784, %v1946, 0.0
        %1983 = vadd.xlane.f32.xlu0 %v1982
        %v1984 = vpop.xlane.xlu0 %1983
        %v1985 = vsel %vm784, %v1947, 0.0
        %1986 = vadd.xlane.f32.xlu0 %v1985
        %v1987 = vpop.xlane.xlu0 %1986
        %v1988 = vsel %vm784, %v1948, 0.0
        %1989 = vadd.xlane.f32.xlu0 %v1988
        %v1990 = vpop.xlane.xlu0 %1989
        %v1991 = vsel %vm784, %v1949, 0.0
        %1992 = vadd.xlane.f32.xlu0 %v1991
        %v1993 = vpop.xlane.xlu0 %1992
        %v1994 = vsel %vm784, %v1950, 0.0
        %1995 = vadd.xlane.f32.xlu0 %v1994
        %v1996 = vpop.xlane.xlu0 %1995
        %v1997 = vsel %vm784, %v1951, 0.0
        %1998 = vadd.xlane.f32.xlu0 %v1997
        %v1999 = vpop.xlane.xlu0 %1998
        %v2000 = vld [vmem:[%s9] sm:$0xff]
        %2002 = vset.pattern.permute.xlu0 0
        %2003 = vperm.xlu0 %2002, %v2000
        %v2004 = vpop.permute.xlu0 %2003
        %v2005 = vperm.slane %v2004, 0
        %v2006 = vperm.slane %v2004, 1
        %v2007 = vperm.slane %v2004, 2
        %v2008 = vperm.slane %v2004, 3
        %v2009 = vperm.slane %v2004, 4
        %v2010 = vperm.slane %v2004, 5
        %v2011 = vperm.slane %v2004, 6
        %v2012 = vperm.slane %v2004, 7
        %v2021 = vmul.f32 %v1954, %v2005
        %v2022 = vmul.f32 %v1957, %v2005
        %v2023 = vmul.f32 %v1960, %v2006
        %v2024 = vmul.f32 %v1963, %v2006
        %v2025 = vmul.f32 %v1966, %v2007
        %v2026 = vmul.f32 %v1969, %v2007
        %v2027 = vmul.f32 %v1972, %v2008
        %v2028 = vmul.f32 %v1975, %v2008
        %v2029 = vmul.f32 %v1978, %v2009
        %v2030 = vmul.f32 %v1981, %v2009
        %v2031 = vmul.f32 %v1984, %v2010
        %v2032 = vmul.f32 %v1987, %v2010
        %v2033 = vmul.f32 %v1990, %v2011
        %v2034 = vmul.f32 %v1993, %v2011
        %v2035 = vmul.f32 %v1996, %v2012
        %v2036 = vmul.f32 %v1999, %v2012
        %v2037 = vld [vmem:[%s10] sm:$0xff]
        %2039 = vset.pattern.permute.xlu0 0
        %2040 = vperm.xlu0 %2039, %v2037
        %v2041 = vpop.permute.xlu0 %2040
        %v2042 = vperm.slane %v2041, 0
        %v2043 = vperm.slane %v2041, 1
        %v2044 = vperm.slane %v2041, 2
        %v2045 = vperm.slane %v2041, 3
        %v2046 = vperm.slane %v2041, 4
        %v2047 = vperm.slane %v2041, 5
        %v2048 = vperm.slane %v2041, 6
        %v2049 = vperm.slane %v2041, 7
        %v2058 = vadd.f32 %v2021, %v2042
        %v2059 = vadd.f32 %v2022, %v2042
        %v2060 = vadd.f32 %v2023, %v2043
        %v2061 = vadd.f32 %v2024, %v2043
        %v2062 = vadd.f32 %v2025, %v2044
        %v2063 = vadd.f32 %v2026, %v2044
        %v2064 = vadd.f32 %v2027, %v2045
        %v2065 = vadd.f32 %v2028, %v2045
        %v2066 = vadd.f32 %v2029, %v2046
        %v2067 = vadd.f32 %v2030, %v2046
        %v2068 = vadd.f32 %v2031, %v2047
        %v2069 = vadd.f32 %v2032, %v2047
        %v2070 = vadd.f32 %v2033, %v2048
        %v2071 = vadd.f32 %v2034, %v2048
        %v2072 = vadd.f32 %v2035, %v2049
        %v2073 = vadd.f32 %v2036, %v2049
        %vm2074 = vcmp.gt.f32.partialorder %v2058, 0.0
        %vm2075 = vcmp.gt.f32.partialorder %v2059, 0.0
        %vm2076 = vcmp.gt.f32.partialorder %v2060, 0.0
        %vm2077 = vcmp.gt.f32.partialorder %v2061, 0.0
        %vm2078 = vcmp.gt.f32.partialorder %v2062, 0.0
        %vm2079 = vcmp.gt.f32.partialorder %v2063, 0.0
        %vm2080 = vcmp.gt.f32.partialorder %v2064, 0.0
        %vm2081 = vcmp.gt.f32.partialorder %v2065, 0.0
        %vm2082 = vcmp.gt.f32.partialorder %v2066, 0.0
        %vm2083 = vcmp.gt.f32.partialorder %v2067, 0.0
        %vm2084 = vcmp.gt.f32.partialorder %v2068, 0.0
        %vm2085 = vcmp.gt.f32.partialorder %v2069, 0.0
        %vm2086 = vcmp.gt.f32.partialorder %v2070, 0.0
        %vm2087 = vcmp.gt.f32.partialorder %v2071, 0.0
        %vm2088 = vcmp.gt.f32.partialorder %v2072, 0.0
        %vm2089 = vcmp.gt.f32.partialorder %v2073, 0.0
        %v2090 = vmul.f32 %v2058, 1.442695
        %v2091 = vpow.pop %v2090
        %v2092 = vmul.f32 %v2059, 1.442695
        %v2093 = vpow.pop %v2092
        %v2094 = vmul.f32 %v2060, 1.442695
        %v2095 = vpow.pop %v2094
        %v2096 = vmul.f32 %v2061, 1.442695
        %v2097 = vpow.pop %v2096
        %v2098 = vmul.f32 %v2062, 1.442695
        %v2099 = vpow.pop %v2098
        %v2100 = vmul.f32 %v2063, 1.442695
        %v2101 = vpow.pop %v2100
        %v2102 = vmul.f32 %v2064, 1.442695
        %v2103 = vpow.pop %v2102
        %v2104 = vmul.f32 %v2065, 1.442695
        %v2105 = vpow.pop %v2104
        %v2106 = vmul.f32 %v2066, 1.442695
        %v2107 = vpow.pop %v2106
        %v2108 = vmul.f32 %v2067, 1.442695
        %v2109 = vpow.pop %v2108
        %v2110 = vmul.f32 %v2068, 1.442695
        %v2111 = vpow.pop %v2110
        %v2112 = vmul.f32 %v2069, 1.442695
        %v2113 = vpow.pop %v2112
        %v2114 = vmul.f32 %v2070, 1.442695
        %v2115 = vpow.pop %v2114
        %v2116 = vmul.f32 %v2071, 1.442695
        %v2117 = vpow.pop %v2116
        %v2118 = vmul.f32 %v2072, 1.442695
        %v2119 = vpow.pop %v2118
        %v2120 = vmul.f32 %v2073, 1.442695
        %v2121 = vpow.pop %v2120
        %v2122 = vsub.f32 %v2091, 1.0
        %v2123 = vsub.f32 %v2093, 1.0
        %v2124 = vsub.f32 %v2095, 1.0
        %v2125 = vsub.f32 %v2097, 1.0
        %v2126 = vsub.f32 %v2099, 1.0
        %v2127 = vsub.f32 %v2101, 1.0
        %v2128 = vsub.f32 %v2103, 1.0
        %v2129 = vsub.f32 %v2105, 1.0
        %v2130 = vsub.f32 %v2107, 1.0
        %v2131 = vsub.f32 %v2109, 1.0
        %v2132 = vsub.f32 %v2111, 1.0
        %v2133 = vsub.f32 %v2113, 1.0
        %v2134 = vsub.f32 %v2115, 1.0
        %v2135 = vsub.f32 %v2117, 1.0
        %v2136 = vsub.f32 %v2119, 1.0
        %v2137 = vsub.f32 %v2121, 1.0
        %v2138 = vsel %vm2074, %v2058, %v2122
        %v2139 = vsel %vm2075, %v2059, %v2123
        %v2140 = vsel %vm2076, %v2060, %v2124
        %v2141 = vsel %vm2077, %v2061, %v2125
        %v2142 = vsel %vm2078, %v2062, %v2126
        %v2143 = vsel %vm2079, %v2063, %v2127
        %v2144 = vsel %vm2080, %v2064, %v2128
        %v2145 = vsel %vm2081, %v2065, %v2129
        %v2146 = vsel %vm2082, %v2066, %v2130
        %v2147 = vsel %vm2083, %v2067, %v2131
        %v2148 = vsel %vm2084, %v2068, %v2132
        %v2149 = vsel %vm2085, %v2069, %v2133
        %v2150 = vsel %vm2086, %v2070, %v2134
        %v2151 = vsel %vm2087, %v2071, %v2135
        %v2152 = vsel %vm2088, %v2072, %v2136
        %v2153 = vsel %vm2089, %v2073, %v2137
        %2170 = vset.pattern.permute.xlu0 0
        %2171 = vperm.xlu0 %2170, %v2138
        %v2172 = vpop.permute.xlu0 %2171
        %2173 = vset.pattern.permute.xlu0 0
        %2174 = vperm.xlu0 %2173, %v2139
        %v2175 = vpop.permute.xlu0 %2174
        %2176 = vset.pattern.permute.xlu0 0
        %2177 = vperm.xlu0 %2176, %v2140
        %v2178 = vpop.permute.xlu0 %2177
        %2179 = vset.pattern.permute.xlu0 0
        %2180 = vperm.xlu0 %2179, %v2141
        %v2181 = vpop.permute.xlu0 %2180
        %2182 = vset.pattern.permute.xlu0 0
        %2183 = vperm.xlu0 %2182, %v2142
        %v2184 = vpop.permute.xlu0 %2183
        %2185 = vset.pattern.permute.xlu0 0
        %2186 = vperm.xlu0 %2185, %v2143
        %v2187 = vpop.permute.xlu0 %2186
        %2188 = vset.pattern.permute.xlu0 0
        %2189 = vperm.xlu0 %2188, %v2144
        %v2190 = vpop.permute.xlu0 %2189
        %2191 = vset.pattern.permute.xlu0 0
        %2192 = vperm.xlu0 %2191, %v2145
        %v2193 = vpop.permute.xlu0 %2192
        %2194 = vset.pattern.permute.xlu0 0
        %2195 = vperm.xlu0 %2194, %v2146
        %v2196 = vpop.permute.xlu0 %2195
        %2197 = vset.pattern.permute.xlu0 0
        %2198 = vperm.xlu0 %2197, %v2147
        %v2199 = vpop.permute.xlu0 %2198
        %2200 = vset.pattern.permute.xlu0 0
        %2201 = vperm.xlu0 %2200, %v2148
        %v2202 = vpop.permute.xlu0 %2201
        %2203 = vset.pattern.permute.xlu0 0
        %2204 = vperm.xlu0 %2203, %v2149
        %v2205 = vpop.permute.xlu0 %2204
        %2206 = vset.pattern.permute.xlu0 0
        %2207 = vperm.xlu0 %2206, %v2150
        %v2208 = vpop.permute.xlu0 %2207
        %2209 = vset.pattern.permute.xlu0 0
        %2210 = vperm.xlu0 %2209, %v2151
        %v2211 = vpop.permute.xlu0 %2210
        %2212 = vset.pattern.permute.xlu0 0
        %2213 = vperm.xlu0 %2212, %v2152
        %v2214 = vpop.permute.xlu0 %2213
        %2215 = vset.pattern.permute.xlu0 0
        %2216 = vperm.xlu0 %2215, %v2153
        %v2217 = vpop.permute.xlu0 %2216
        %v2218 = vperm.slane %v2172, %v460
        %v2219 = vperm.slane %v2175, %v1330
        %v2220 = vsel %vm1332, %v2219, %v2218
        %v2221 = vperm.slane %v2178, %v460
        %v2222 = vperm.slane %v2181, %v1330
        %v2223 = vsel %vm1332, %v2222, %v2221
        %v2224 = vperm.slane %v2184, %v460
        %v2225 = vperm.slane %v2187, %v1330
        %v2226 = vsel %vm1332, %v2225, %v2224
        %v2227 = vperm.slane %v2190, %v460
        %v2228 = vperm.slane %v2193, %v1330
        %v2229 = vsel %vm1332, %v2228, %v2227
        %v2230 = vperm.slane %v2196, %v460
        %v2231 = vperm.slane %v2199, %v1330
        %v2232 = vsel %vm1332, %v2231, %v2230
        %v2233 = vperm.slane %v2202, %v460
        %v2234 = vperm.slane %v2205, %v1330
        %v2235 = vsel %vm1332, %v2234, %v2233
        %v2236 = vperm.slane %v2208, %v460
        %v2237 = vperm.slane %v2211, %v1330
        %v2238 = vsel %vm1332, %v2237, %v2236
        %v2239 = vperm.slane %v2214, %v460
        %v2240 = vperm.slane %v2217, %v1330
        %v2241 = vsel %vm1332, %v2240, %v2239
        %v2242 = vsel %vm1355, %v2223, %v2220
        %v2243 = vsel %vm1357, %v2226, %v2242
        %v2244 = vsel %vm1359, %v2229, %v2243
        %v2245 = vsel %vm1361, %v2232, %v2244
        %v2246 = vsel %vm1363, %v2235, %v2245
        %v2247 = vsel %vm1365, %v2238, %v2246
        %v2248 = vsel %vm1367, %v2241, %v2247
        %2250 = vst.msk [vmem:[%s434] sm:$0xff] %vm784, %v2248
        %s2251 = sand.u32 %s282, 1
        %s2252 = scalar_lea.sflag [#allocation4], %s2251
        %s2253 = sand.u32 %s282, 1
        %s2254 = smul.addr %s2253, 8
        %s2255 = scalar_lea.vmem [#allocation5], %s2254
        // Predicated region
        $region69: #{tpu_custom_call.1} parent=63 // pred_check
          %p2256 = pneg %p292
        $region70: #{tpu_custom_call.1} parent=63 // pred_check_branch
          %2258 = sbr.rel (%p2256) target = $region72
        $region71: #{tpu_custom_call.1} parent=63 // pred_region
          %2260 = vsyncadd %s2252, 0
          %s2261 = smul.addr %s28, 8
          %s2262 = scalar_lea.hbm %s11, %s2261
          %s2264 = sshll.u32 %s2255, 4
          %s2265 = int_to_ptr.vmem [resolvable:$true] %s2264
          %s2266 = sshll.u32 %s2262, 4
          %s2267 = int_to_ptr.hbm [resolvable:$true] %s2266
          %2269 = dma.vmem_to_hbm [thread:$0]  %s2265, 128, %s2267, %s2252
        $region72: #{tpu_custom_call.1} parent=63 // pred_fallthru
          _
      $region64: #{tpu_custom_call.1} parent=5 // pred_fallthru
        _
      %p2270 = scmp.le.s32.totalorder 2, %s23
      // Predicated region
      $region73: #{tpu_custom_call.1} parent=5 // pred_check
        %p2271 = pneg %p2270
      $region74: #{tpu_custom_call.1} parent=5 // pred_check_branch
        %2273 = sbr.rel (%p2271) target = $region76
      $region75: #{tpu_custom_call.1} parent=5 // pred_region
        %s2274 = ssub.s32 %s23, 2
        // Predicated region
        $region77: #{tpu_custom_call.1} parent=75 // pred_check
          %p2275 = pneg %p298
        $region78: #{tpu_custom_call.1} parent=75 // pred_check_branch
          %2277 = sbr.rel (%p2275) target = $region80
        $region79: #{tpu_custom_call.1} parent=75 // pred_region
          %s2278 = sand.u32 %s283, 1
          %s2279 = scalar_lea.sflag [#allocation4], %s2278
          %s2280 = sand.u32 %s283, 1
          %s2281 = smul.addr %s2280, 8
          %s2282 = scalar_lea.vmem [#allocation5], %s2281
          %2284 = dma.done %s2279, 128
        $region80: #{tpu_custom_call.1} parent=75 // pred_fallthru
          _
      $region76: #{tpu_custom_call.1} parent=5 // pred_fallthru
        _
    $region6: #{tpu_custom_call.1} parent=1 // loop_footer
      %s27 = sadd.s32 1, %s23
    $region7: #{tpu_custom_call.1} parent=1 // loop_footer_branch
      %22 = sbr.rel target = $region3
    $region8: #{tpu_custom_call.1} parent=1 // loop_exit
      _
    %2285 = vsyncpa [#allocation3], 1
    %s2286 = scalar_lea.sflag [#allocation3], 1
    %2287 = vsyncpa %s2286, 1
    %2288 = vsyncpa [#allocation4], 1
    %s2289 = scalar_lea.sflag [#allocation4], 1
    %2290 = vsyncpa %s2289, 1

</llo_original>
